<compile_context>
chip_gen: v5e
topology: v5e:2x2
jax: 0.10.0
libtpu: 0.0.40
codegen_flags: <defaults>
</compile_context>

<pallas_src>
import math
import numpy as np
import jax
import jax.numpy as jnp
from jax.experimental import pallas as pl
from jax.experimental.pallas import tpu as pltpu

# ----------------------- static configuration (small shapes) -----------------------
D_I = 16                 # input_feature_dim (width of the noise-encoding branch)
D_MODEL = 32             # output_feature_dim d (transformer d_model)
D_NOISE = 8              # noise_depth
TRAJ_CHANNELS = 4        # number of predicted "styles" (Kc)
TSTEPS_EN, TCH_EN = 8, 2   # Tlayer.Tshape   (identity transform of observed traj)
TSTEPS_DE, TCH_DE = 8, 2   # iTlayer.Tshape  (identity inverse transform)
NUM_HEADS = 8
NUM_LAYERS = 4
DFF = 512
F_DIFF_DIM = D_MODEL - D_I   # feature dim of f_ego_diff so concat([f, f_z]) == d_model

# -------- packed-operand / packed-output widths (all static Python ints) -----------
K12 = TRAJ_CHANNELS + TSTEPS_DE            # 12 fused k1|k2 columns
KW = 16                                    # fused weight slab width (12 used, 4 pad)
Y_W = TRAJ_CHANNELS * TSTEPS_DE * TCH_DE   # 64 packed y lanes
K1_W = TSTEPS_EN * TRAJ_CHANNELS           # 32 packed k1 lanes
K2_W = TSTEPS_EN * TSTEPS_DE               # 64 packed k2 lanes
OUT_W = 256                                # merged output width (2 x 128, unmasked DMA)
BT_CAP = 256                               # max batch rows per grid step


def _round_up(x, m):
    return ((x + m - 1) // m) * m


def _choose_bt(b_total):
    """Rows per grid step: multiple of 8 (output sublane tiling), >=2 grid steps when
    the batch allows it (v7x megacore), capped so the padded (bt,8,32) intermediates
    stay comfortably inside the 16/32 MiB scoped-VMEM defaults."""
    b8 = _round_up(max(int(b_total), 1), 8)
    if b8 <= 8:
        return 8
    return min(BT_CAP, _round_up(-(-b8 // 2), 8))


# ======================= Pallas kernel: reverberation block =========================
def _reverb_kernel(ft_ref, w_ref, c_ref, out_ref):
    # ft_ref : (bt*Ten, d) transformer features, row = b*Ten + t
    # w_ref  : (d, KW)      fused [wk1 | wk2 | 0] weights
    # c_ref  : (8, OUT_W)   packed constants:
    #            row 0, 0:K12     -> fused [bk1 | bk2] bias
    #            row 1, 0:TCH_DE  -> decoder bias bd
    #            row 2, 0:D_MODEL -> wd[:, 0]
    #            row 3, 0:D_MODEL -> wd[:, 1]
    # out_ref: (bt, OUT_W) = [ y(64) | k1(32) | k2(64) | zeros(96) ]  (one dense block)
    m8, d = ft_ref.shape
    bt = m8 // TSTEPS_EN
    ft2d = ft_ref[...]

    # (1) fused self-generating + self-reverberation kernels: ONE matmul + ONE tanh.
    k12 = jnp.tanh(jnp.dot(ft2d, w_ref[...], preferred_element_type=jnp.float32)
                   + c_ref[0:1, 0:KW])                                # (bt*Ten, KW)

    # free row-tile regroups (TSTEPS_EN == 8 == native sublane count)
    ft3 = ft2d.reshape(bt, TSTEPS_EN, d)                              # (bt, Ten, d)
    k12_3 = k12.reshape(bt, TSTEPS_EN, KW)
    k1_3 = k12_3[:, :, 0:TRAJ_CHANNELS]                               # (bt, Ten, Kc)
    k2_3 = k12_3[:, :, TRAJ_CHANNELS:K12]                             # (bt, Ten, Tde)

    # (2) r[b,tau,c] = sum_t k2[b,t,tau] * ft[b,t,c]                  # (bt, Tde, d)
    r = jnp.sum(k2_3[:, :, :, None] * ft3[:, :, None, :], axis=1)

    # decoder weight folded into r (no N=2 MXU matmul, no output relayout)
    rw = tuple(r * c_ref[2 + o:3 + o, 0:D_MODEL].reshape(1, 1, D_MODEL)
               for o in range(TCH_DE))                                # TCH_DE x (bt,Tde,d)

    # (3) per-style s_m (full-sublane (bt,Ten,d) intermediates) and packed y:
    #     y[b, m, o, tau] = sum_c s_m[b,c] * r[b,tau,c] * wd[c,o] + bd[o]
    #     written straight to lanes m*16 + o*8 + tau of the merged output block.
    for m_i in range(TRAJ_CHANNELS):
        s_m = jnp.sum(k1_3[:, :, m_i:m_i + 1] * ft3, axis=1)          # (bt, d)
        s_b = s_m[:, None, :]                                         # (bt, 1, d)
        for o in range(TCH_DE):
            col = (m_i * TCH_DE + o) * TSTEPS_DE
            out_ref[:, col:col + TSTEPS_DE] = (
                jnp.sum(s_b * rw[o], axis=-1) + c_ref[1:2, o:o + 1])  # (bt, Tde)

    # (4) k1 / k2 packed lane-dense (tiny sublane->lane relayouts, one store each)
    out_ref[:, Y_W:Y_W + K1_W] = k1_3.reshape(bt, K1_W)               # lane = t*Kc + m
    out_ref[:, Y_W + K1_W:Y_W + K1_W + K2_W] = k2_3.reshape(bt, K2_W)  # lane = t*Tde + tau
    out_ref[:, Y_W + K1_W + K2_W:OUT_W] = jnp.zeros(
        (bt, OUT_W - Y_W - K1_W - K2_W), jnp.float32)


def reverb(f_tran, wk1, bk1, wk2, bk2, wd, bd):
    """Self-generating/self-reverberation kernels + decoder for a (B, Ten, d) batch."""
    B = f_tran.shape[0]
    bt = _choose_bt(B)
    n_steps = -(-B // bt)
    b_pad = n_steps * bt
    if b_pad != B:
        f_tran = jnp.pad(f_tran, ((0, b_pad - B), (0, 0), (0, 0)))
    ft2d = f_tran.reshape(b_pad * TSTEPS_EN, D_MODEL)

    # ---- pack the six weight/bias operands into two constant slabs (trace-time) ----
    w_slab = jnp.zeros((D_MODEL, KW), jnp.float32)
    w_slab = w_slab.at[:, 0:TRAJ_CHANNELS].set(wk1)
    w_slab = w_slab.at[:, TRAJ_CHANNELS:K12].set(wk2)

    c_slab = jnp.zeros((8, OUT_W), jnp.float32)
    c_slab = c_slab.at[0, 0:TRAJ_CHANNELS].set(bk1)
    c_slab = c_slab.at[0, TRAJ_CHANNELS:K12].set(bk2)
    c_slab = c_slab.at[1, 0:TCH_DE].set(bd)
    c_slab = c_slab.at[2, 0:D_MODEL].set(wd[:, 0])
    c_slab = c_slab.at[3, 0:D_MODEL].set(wd[:, 1])

    out = pl.pallas_call(
        _reverb_kernel,
        out_shape=jax.ShapeDtypeStruct((b_pad, OUT_W), jnp.float32),
        grid_spec=pltpu.PrefetchScalarGridSpec(
            num_scalar_prefetch=0,
            grid=(n_steps,),
            in_specs=[
                pl.BlockSpec((bt * TSTEPS_EN, D_MODEL), lambda i: (i, 0)),
                pl.BlockSpec((D_MODEL, KW), lambda i: (0, 0)),
                pl.BlockSpec((8, OUT_W), lambda i: (0, 0)),
            ],
            out_specs=pl.BlockSpec((bt, OUT_W), lambda i: (i, 0)),
        ),
        compiler_params=pltpu.CompilerParams(
            dimension_semantics=("parallel",),
            vmem_limit_bytes=32 * 1024 * 1024),
    )(ft2d, w_slab, c_slab)

    out = out[:B]
    y = out[:, 0:Y_W].reshape(B, TRAJ_CHANNELS, TCH_DE, TSTEPS_DE)
    y = jnp.transpose(y, (0, 1, 3, 2))                       # (B, Kc, Tde, Tch_de)
    k1 = out[:, Y_W:Y_W + K1_W].reshape(B, TSTEPS_EN, TRAJ_CHANNELS)
    k2 = out[:, Y_W + K1_W:Y_W + K1_W + K2_W].reshape(B, TSTEPS_EN, TSTEPS_DE)
    return y, k1, k2


# ---- pure-JAX literal reference of the outer-product path (for numerical check) ----
def reverb_reference(f_tran, wk1, bk1, wk2, bk2, wd, bd):
    with jax.default_matmul_precision("highest"):
        k1 = jnp.tanh(f_tran @ wk1 + bk1)                      # (B, Ten, Kc)
        k2 = jnp.tanh(f_tran @ wk2 + bk2)                      # (B, Ten, Tde)
        ftt = jnp.swapaxes(f_tran, -1, -2)                     # (B, d, Ten)
        f_o = ftt[..., :, None] * ftt[..., None, :]            # OuterLayer (B,d,Ten,Ten)
        f1 = f_o @ k1[:, None, :, :]                           # (B, d, Ten, Kc)
        f2 = jnp.swapaxes(f1, -1, -2) @ k2[:, None, :, :]      # (B, d, Kc, Tde)
        f2 = jnp.transpose(f2, (0, 2, 3, 1))                   # permute [0,2,3,1]
        y = f2 @ wd + bd                                       # decoder Dense
    return y, k1, k2


# ============== noise TrajEncoding + concat (plain jnp — per perf review) ==========
def ie_concat(f, z, w, b):
    # A dedicated pallas_call launch costs more than this Dense+Tanh+concat; leaving it
    # in plain JAX lets XLA fuse it with the encoder-embedding matmul of the backbone.
    fz = jnp.tanh(z @ w + b)
    return jnp.concatenate([f, fz], axis=-1)


# ====================== Transformer backbone (plain-JAX glue) =======================
def _dense_init(key, din, dout):
    w = jax.random.normal(key, (din, dout), jnp.float32) * (1.0 / math.sqrt(din))
    b = jnp.zeros((dout,), jnp.float32)
    return {"w": w, "b": b}


def _dense(p, x, act=None):
    y = x @ p["w"] + p["b"]
    return act(y) if act is not None else y


def _layer_norm(x, eps=1e-6):
    mu = jnp.mean(x, axis=-1, keepdims=True)
    var = jnp.mean((x - mu) ** 2, axis=-1, keepdims=True)
    return (x - mu) * jax.lax.rsqrt(var + eps)


def _mha_init(key, d):
    ks = jax.random.split(key, 4)
    return {n: _dense_init(k, d, d) for n, k in zip(("q", "k", "v", "o"), ks)}


def _mha(p, q, k, v, mask=None):
    B, Lq, D = q.shape
    Lk = k.shape[1]
    dh = D // NUM_HEADS

    def split(x, L):
        return x.reshape(B, L, NUM_HEADS, dh).transpose(0, 2, 1, 3)

    qh = split(_dense(p["q"], q), Lq)
    kh = split(_dense(p["k"], k), Lk)
    vh = split(_dense(p["v"], v), Lk)
    scores = jnp.einsum("bhqd,bhkd->bhqk", qh, kh) / math.sqrt(dh)
    if mask is not None:
        scores = scores - 1e9 * mask[None, None]
    attn = jax.nn.softmax(scores, axis=-1)
    ctx = jnp.einsum("bhqk,bhkd->bhqd", attn, vh)
    ctx = ctx.transpose(0, 2, 1, 3).reshape(B, Lq, D)
    return _dense(p["o"], ctx)


def _enc_layer_init(key, d):
    ks = jax.random.split(key, 3)
    return {"mha": _mha_init(ks[0], d),
            "ff1": _dense_init(ks[1], d, DFF),
            "ff2": _dense_init(ks[2], DFF, d)}


def _dec_layer_init(key, d):
    ks = jax.random.split(key, 4)
    return {"mha1": _mha_init(ks[0], d), "mha2": _mha_init(ks[1], d),
            "ff1": _dense_init(ks[2], d, DFF), "ff2": _dense_init(ks[3], DFF, d)}


def _enc_layer(p, x):
    x = _layer_norm(x + _mha(p["mha"], x, x, x))
    f = _dense(p["ff2"], _dense(p["ff1"], x, jax.nn.relu))
    return _layer_norm(x + f)


def _dec_layer(p, x, enc_out, la_mask):
    x = _layer_norm(x + _mha(p["mha1"], x, x, x, mask=la_mask))
    x = _layer_norm(x + _mha(p["mha2"], x, enc_out, enc_out))
    f = _dense(p["ff2"], _dense(p["ff1"], x, jax.nn.relu))
    return _layer_norm(x + f)


def _positional_encoding(length, d):
    pos = np.arange(length)[:, None].astype(np.float64)
    i = np.arange(d)[None, :].astype(np.float64)
    angle = pos / np.power(10000.0, (2.0 * (i // 2)) / d)
    pe = np.zeros((length, d))
    pe[:, 0::2] = np.sin(angle[:, 0::2])
    pe[:, 1::2] = np.cos(angle[:, 1::2])
    return jnp.asarray(pe, jnp.float32)


def transformer_apply(p, inputs, targets):
    # include_top=False -> returns raw decoder features (B, Tsteps_en, d_model).
    _, Le, _ = inputs.shape
    Lt = targets.shape[1]
    scale = math.sqrt(D_MODEL)
    x = _dense(p["enc_emb"], inputs) * scale + p["pe"][None, :Le]
    for lyr in p["enc_layers"]:
        x = _enc_layer(lyr, x)
    la_mask = jnp.triu(jnp.ones((Lt, Lt), jnp.float32), k=1)
    y = _dense(p["dec_emb"], targets) * scale + p["pe"][None, :Lt]
    for lyr in p["dec_layers"]:
        y = _dec_layer(lyr, y, x, la_mask)
    return y


# ================================ parameter init ====================================
def init_params(key):
    keys = list(jax.random.split(key, 8))
    p = {
        "ie":  _dense_init(keys[0], D_NOISE, D_I),             # TrajEncoding(d_noise->d_i)
        "k1":  _dense_init(keys[1], D_MODEL, TRAJ_CHANNELS),   # self-generating kernel
        "k2":  _dense_init(keys[2], D_MODEL, TSTEPS_DE),       # self-reverberation kernel
        "dec": _dense_init(keys[3], D_MODEL, TCH_DE),          # decoder Dense
    }
    enc_keys = jax.random.split(keys[4], NUM_LAYERS)
    dec_keys = jax.random.split(keys[5], NUM_LAYERS)
    p["T"] = {
        "enc_emb": _dense_init(keys[6], D_MODEL, D_MODEL),
        "dec_emb": _dense_init(keys[7], TCH_EN, D_MODEL),
        "pe": _positional_encoding(max(TSTEPS_EN, TSTEPS_DE), D_MODEL),
        "enc_layers": [_enc_layer_init(k, D_MODEL) for k in enc_keys],
        "dec_layers": [_dec_layer_init(k, D_MODEL) for k in dec_keys],
    }
    return p


# =================================== forward ========================================
def self_reverberation_forward(params, f_ego_diff, linear_fit, repeats=1, noise_key=None):
    # Tlayer / iTlayer are identity transforms.
    traj_targets = linear_fit
    B, Ten, _ = f_ego_diff.shape
    R = repeats

    # Repeats vectorized BATCH-MAJOR (B outermost): one transformer call, one
    # pallas_call, no output transpose, last-repeat k1/k2 is a plain strided slice.
    z = jax.random.normal(noise_key, (B, R, Ten, D_NOISE), jnp.float32)
    f_rep = jnp.broadcast_to(f_ego_diff[:, None], (B, R, Ten, F_DIFF_DIM))
    t_rep = jnp.broadcast_to(traj_targets[:, None], (B, R, Ten, TCH_EN))

    f_flat = f_rep.reshape(B * R, Ten, F_DIFF_DIM)
    z_flat = z.reshape(B * R, Ten, D_NOISE)
    t_flat = t_rep.reshape(B * R, Ten, TCH_EN)

    f_final = ie_concat(f_flat, z_flat, params["ie"]["w"], params["ie"]["b"])   # XLA-fused
    f_tran = transformer_apply(params["T"], f_final, t_flat)                    # JAX glue

    y_all, k1_all, k2_all = reverb(f_tran,
                                   params["k1"]["w"], params["k1"]["b"],
                                   params["k2"]["w"], params["k2"]["b"],
                                   params["dec"]["w"], params["dec"]["b"])      # Pallas

    # torch.concat(all_predictions, dim=-3): repeats stacked repeat-major per sample.
    y = y_all.reshape(B, R * TRAJ_CHANNELS, TSTEPS_DE, TCH_DE)
    # PyTorch returns k1/k2 from the last loop iteration.
    k1 = k1_all.reshape(B, R, TSTEPS_EN, TRAJ_CHANNELS)[:, -1]
    k2 = k2_all.reshape(B, R, TSTEPS_EN, TSTEPS_DE)[:, -1]
    return y, k1, k2


# ===================================== main =========================================
if __name__ == "__main__":
    key = jax.random.PRNGKey(0)
    kp, kf, kl, kz, kt = jax.random.split(key, 5)

    params = init_params(kp)
    B = 2
    REPEATS = 2
    f_ego_diff = jax.random.normal(kf, (B, TSTEPS_EN, F_DIFF_DIM), jnp.float32)
    linear_fit = jax.random.normal(kl, (B, TSTEPS_EN, TCH_EN), jnp.float32)

    # ---- numerical check: Pallas kernel vs the literal outer-product/permute path ----
    ft_test = jax.random.normal(kt, (B * REPEATS, TSTEPS_EN, D_MODEL), jnp.float32)
    y_p, k1_p, k2_p = reverb(ft_test, params["k1"]["w"], params["k1"]["b"],
                             params["k2"]["w"], params["k2"]["b"],
                             params["dec"]["w"], params["dec"]["b"])
    y_r, k1_r, k2_r = reverb_reference(ft_test, params["k1"]["w"], params["k1"]["b"],
                                       params["k2"]["w"], params["k2"]["b"],
                                       params["dec"]["w"], params["dec"]["b"])
    jax.block_until_ready((y_p, y_r))
    assert bool(jnp.allclose(k1_p, k1_r, rtol=1e-3, atol=1e-3))
    assert bool(jnp.allclose(k2_p, k2_r, rtol=1e-3, atol=1e-3))
    assert bool(jnp.allclose(y_p, y_r, rtol=1e-3, atol=1e-3))

    # ---- full forward ---------------------------------------------------------------
    y, k1, k2 = self_reverberation_forward(params, f_ego_diff, linear_fit,
                                           repeats=REPEATS, noise_key=kz)
    jax.block_until_ready((y, k1, k2))

    assert y.shape == (B, REPEATS * TRAJ_CHANNELS, TSTEPS_DE, TCH_DE), y.shape
    assert k1.shape == (B, TSTEPS_EN, TRAJ_CHANNELS), k1.shape
    assert k2.shape == (B, TSTEPS_EN, TSTEPS_DE), k2.shape
    assert bool(jnp.all(jnp.isfinite(y)))
    print("KERNEL_OK")
</pallas_src>

<mosaic_0001>
module attributes {stable_mosaic.version = 11 : i64} {
  func.func @_reverb_kernel(%arg0: i32, %arg1: memref<64x32xf32, #tpu.memory_space<vmem>>, %arg2: memref<32x16xf32, #tpu.memory_space<vmem>>, %arg3: memref<8x256xf32, #tpu.memory_space<vmem>>, %arg4: memref<8x256xf32, #tpu.memory_space<vmem>>) attributes {dimension_semantics = [#tpu.dimension_semantics<parallel>], iteration_bounds = array<i64: 1>, scalar_prefetch = 0 : i64, scratch_operands = 0 : i64, tpu.core_type = #tpu.core_type<tc>, window_params = [{transform_indices = @transform_0, window_bounds = array<i64: 64, 32>}, {pipeline_mode = #tpu.pipeline_mode<synchronous>, transform_indices = @transform_1, window_bounds = array<i64: 32, 16>}, {pipeline_mode = #tpu.pipeline_mode<synchronous>, transform_indices = @transform_2, window_bounds = array<i64: 8, 256>}, {transform_indices = @transform_3, window_bounds = array<i64: 8, 256>}]} {
    %c0 = arith.constant 0 : index
    %c0_0 = arith.constant 0 : index
    %0 = vector.load %arg1[%c0, %c0_0] : memref<64x32xf32, #tpu.memory_space<vmem>>, vector<64x32xf32>
    %c0_1 = arith.constant 0 : index
    %c0_2 = arith.constant 0 : index
    %1 = vector.load %arg2[%c0_1, %c0_2] : memref<32x16xf32, #tpu.memory_space<vmem>>, vector<32x16xf32>
    %cst = arith.constant dense<0.000000e+00> : vector<64x16xf32>
    %2 = tpu.matmul %0, %1, %cst {dimension_numbers = #tpu.dot_dimension_numbers<[1], [0], [0], [1], [0, 0, 1, 1], [], []>} : vector<64x32xf32>, vector<32x16xf32>, vector<64x16xf32> -> vector<64x16xf32>
    %c0_3 = arith.constant 0 : index
    %c0_4 = arith.constant 0 : index
    %3 = vector.load %arg3[%c0_3, %c0_4] : memref<8x256xf32, #tpu.memory_space<vmem>>, vector<1x16xf32>
    %4 = vector.broadcast %3 : vector<1x16xf32> to vector<64x16xf32>
    %5 = arith.addf %2, %4 : vector<64x16xf32>
    %6 = math.tanh %5 : vector<64x16xf32>
    %7 = vector.shape_cast %0 : vector<64x32xf32> to vector<8x8x32xf32>
    %8 = vector.shape_cast %6 : vector<64x16xf32> to vector<8x8x16xf32>
    %9 = vector.extract_strided_slice %8 {offsets = [0, 0, 0], sizes = [8, 8, 4], strides = [1, 1, 1]} : vector<8x8x16xf32> to vector<8x8x4xf32>
    %10 = vector.extract_strided_slice %8 {offsets = [0, 0, 4], sizes = [8, 8, 8], strides = [1, 1, 1]} : vector<8x8x16xf32> to vector<8x8x8xf32>
    %11 = vector.shape_cast %10 : vector<8x8x8xf32> to vector<8x8x8x1xf32>
    %12 = vector.shape_cast %7 : vector<8x8x32xf32> to vector<8x8x1x32xf32>
    %13 = vector.broadcast %11 : vector<8x8x8x1xf32> to vector<8x8x8x32xf32>
    %14 = vector.broadcast %12 : vector<8x8x1x32xf32> to vector<8x8x8x32xf32>
    %15 = arith.mulf %13, %14 : vector<8x8x8x32xf32>
    %cst_5 = arith.constant dense<0.000000e+00> : vector<8x8x32xf32>
    %16 = vector.multi_reduction <add>, %15, %cst_5 [1] : vector<8x8x8x32xf32> to vector<8x8x32xf32>
    %c2 = arith.constant 2 : index
    %c0_6 = arith.constant 0 : index
    %17 = vector.load %arg3[%c2, %c0_6] : memref<8x256xf32, #tpu.memory_space<vmem>>, vector<1x32xf32>
    %18 = vector.shape_cast %17 : vector<1x32xf32> to vector<1x1x32xf32>
    %19 = vector.broadcast %18 : vector<1x1x32xf32> to vector<8x8x32xf32>
    %20 = arith.mulf %16, %19 : vector<8x8x32xf32>
    %c3 = arith.constant 3 : index
    %c0_7 = arith.constant 0 : index
    %21 = vector.load %arg3[%c3, %c0_7] : memref<8x256xf32, #tpu.memory_space<vmem>>, vector<1x32xf32>
    %22 = vector.shape_cast %21 : vector<1x32xf32> to vector<1x1x32xf32>
    %23 = vector.broadcast %22 : vector<1x1x32xf32> to vector<8x8x32xf32>
    %24 = arith.mulf %16, %23 : vector<8x8x32xf32>
    %25 = vector.extract_strided_slice %9 {offsets = [0, 0, 0], sizes = [8, 8, 1], strides = [1, 1, 1]} : vector<8x8x4xf32> to vector<8x8x1xf32>
    %26 = vector.broadcast %25 : vector<8x8x1xf32> to vector<8x8x32xf32>
    %27 = arith.mulf %26, %7 : vector<8x8x32xf32>
    %cst_8 = arith.constant dense<0.000000e+00> : vector<8x32xf32>
    %28 = vector.multi_reduction <add>, %27, %cst_8 [1] : vector<8x8x32xf32> to vector<8x32xf32>
    %29 = vector.shape_cast %28 : vector<8x32xf32> to vector<8x1x32xf32>
    %30 = vector.broadcast %29 : vector<8x1x32xf32> to vector<8x8x32xf32>
    %31 = arith.mulf %30, %20 : vector<8x8x32xf32>
    %cst_9 = arith.constant dense<0.000000e+00> : vector<8x8xf32>
    %32 = vector.multi_reduction <add>, %31, %cst_9 [2] : vector<8x8x32xf32> to vector<8x8xf32>
    %c1 = arith.constant 1 : index
    %c0_10 = arith.constant 0 : index
    %33 = vector.load %arg3[%c1, %c0_10] : memref<8x256xf32, #tpu.memory_space<vmem>>, vector<1x1xf32>
    %34 = vector.broadcast %33 : vector<1x1xf32> to vector<8x8xf32>
    %35 = arith.addf %32, %34 : vector<8x8xf32>
    %c0_11 = arith.constant 0 : index
    %c0_12 = arith.constant 0 : index
    %36 = vector.load %arg4[%c0_11, %c0_12] : memref<8x256xf32, #tpu.memory_space<vmem>>, vector<8x8xf32>
    tpu.vector_store %arg4[%c0_11, %c0_12], %35 {strides = array<i32>} : memref<8x256xf32, #tpu.memory_space<vmem>>, vector<8x8xf32>,
    %37 = vector.broadcast %29 : vector<8x1x32xf32> to vector<8x8x32xf32>
    %38 = arith.mulf %37, %24 : vector<8x8x32xf32>
    %cst_13 = arith.constant dense<0.000000e+00> : vector<8x8xf32>
    %39 = vector.multi_reduction <add>, %38, %cst_13 [2] : vector<8x8x32xf32> to vector<8x8xf32>
    %c1_14 = arith.constant 1 : index
    %c1_15 = arith.constant 1 : index
    %40 = vector.load %arg3[%c1_14, %c1_15] : memref<8x256xf32, #tpu.memory_space<vmem>>, vector<1x1xf32>
    %41 = vector.broadcast %40 : vector<1x1xf32> to vector<8x8xf32>
    %42 = arith.addf %39, %41 : vector<8x8xf32>
    %c0_16 = arith.constant 0 : index
    %c8 = arith.constant 8 : index
    %43 = vector.load %arg4[%c0_16, %c8] : memref<8x256xf32, #tpu.memory_space<vmem>>, vector<8x8xf32>
    tpu.vector_store %arg4[%c0_16, %c8], %42 {strides = array<i32>} : memref<8x256xf32, #tpu.memory_space<vmem>>, vector<8x8xf32>,
    %44 = vector.extract_strided_slice %9 {offsets = [0, 0, 1], sizes = [8, 8, 1], strides = [1, 1, 1]} : vector<8x8x4xf32> to vector<8x8x1xf32>
    %45 = vector.broadcast %44 : vector<8x8x1xf32> to vector<8x8x32xf32>
    %46 = arith.mulf %45, %7 : vector<8x8x32xf32>
    %cst_17 = arith.constant dense<0.000000e+00> : vector<8x32xf32>
    %47 = vector.multi_reduction <add>, %46, %cst_17 [1] : vector<8x8x32xf32> to vector<8x32xf32>
    %48 = vector.shape_cast %47 : vector<8x32xf32> to vector<8x1x32xf32>
    %49 = vector.broadcast %48 : vector<8x1x32xf32> to vector<8x8x32xf32>
    %50 = arith.mulf %49, %20 : vector<8x8x32xf32>
    %cst_18 = arith.constant dense<0.000000e+00> : vector<8x8xf32>
    %51 = vector.multi_reduction <add>, %50, %cst_18 [2] : vector<8x8x32xf32> to vector<8x8xf32>
    %c1_19 = arith.constant 1 : index
    %c0_20 = arith.constant 0 : index
    %52 = vector.load %arg3[%c1_19, %c0_20] : memref<8x256xf32, #tpu.memory_space<vmem>>, vector<1x1xf32>
    %53 = vector.broadcast %52 : vector<1x1xf32> to vector<8x8xf32>
    %54 = arith.addf %51, %53 : vector<8x8xf32>
    %c0_21 = arith.constant 0 : index
    %c16 = arith.constant 16 : index
    %55 = vector.load %arg4[%c0_21, %c16] : memref<8x256xf32, #tpu.memory_space<vmem>>, vector<8x8xf32>
    tpu.vector_store %arg4[%c0_21, %c16], %54 {strides = array<i32>} : memref<8x256xf32, #tpu.memory_space<vmem>>, vector<8x8xf32>,
    %56 = vector.broadcast %48 : vector<8x1x32xf32> to vector<8x8x32xf32>
    %57 = arith.mulf %56, %24 : vector<8x8x32xf32>
    %cst_22 = arith.constant dense<0.000000e+00> : vector<8x8xf32>
    %58 = vector.multi_reduction <add>, %57, %cst_22 [2] : vector<8x8x32xf32> to vector<8x8xf32>
    %c1_23 = arith.constant 1 : index
    %c1_24 = arith.constant 1 : index
    %59 = vector.load %arg3[%c1_23, %c1_24] : memref<8x256xf32, #tpu.memory_space<vmem>>, vector<1x1xf32>
    %60 = vector.broadcast %59 : vector<1x1xf32> to vector<8x8xf32>
    %61 = arith.addf %58, %60 : vector<8x8xf32>
    %c0_25 = arith.constant 0 : index
    %c24 = arith.constant 24 : index
    %62 = vector.load %arg4[%c0_25, %c24] : memref<8x256xf32, #tpu.memory_space<vmem>>, vector<8x8xf32>
    tpu.vector_store %arg4[%c0_25, %c24], %61 {strides = array<i32>} : memref<8x256xf32, #tpu.memory_space<vmem>>, vector<8x8xf32>,
    %63 = vector.extract_strided_slice %9 {offsets = [0, 0, 2], sizes = [8, 8, 1], strides = [1, 1, 1]} : vector<8x8x4xf32> to vector<8x8x1xf32>
    %64 = vector.broadcast %63 : vector<8x8x1xf32> to vector<8x8x32xf32>
    %65 = arith.mulf %64, %7 : vector<8x8x32xf32>
    %cst_26 = arith.constant dense<0.000000e+00> : vector<8x32xf32>
    %66 = vector.multi_reduction <add>, %65, %cst_26 [1] : vector<8x8x32xf32> to vector<8x32xf32>
    %67 = vector.shape_cast %66 : vector<8x32xf32> to vector<8x1x32xf32>
    %68 = vector.broadcast %67 : vector<8x1x32xf32> to vector<8x8x32xf32>
    %69 = arith.mulf %68, %20 : vector<8x8x32xf32>
    %cst_27 = arith.constant dense<0.000000e+00> : vector<8x8xf32>
    %70 = vector.multi_reduction <add>, %69, %cst_27 [2] : vector<8x8x32xf32> to vector<8x8xf32>
    %c1_28 = arith.constant 1 : index
    %c0_29 = arith.constant 0 : index
    %71 = vector.load %arg3[%c1_28, %c0_29] : memref<8x256xf32, #tpu.memory_space<vmem>>, vector<1x1xf32>
    %72 = vector.broadcast %71 : vector<1x1xf32> to vector<8x8xf32>
    %73 = arith.addf %70, %72 : vector<8x8xf32>
    %c0_30 = arith.constant 0 : index
    %c32 = arith.constant 32 : index
    %74 = vector.load %arg4[%c0_30, %c32] : memref<8x256xf32, #tpu.memory_space<vmem>>, vector<8x8xf32>
    tpu.vector_store %arg4[%c0_30, %c32], %73 {strides = array<i32>} : memref<8x256xf32, #tpu.memory_space<vmem>>, vector<8x8xf32>,
    %75 = vector.broadcast %67 : vector<8x1x32xf32> to vector<8x8x32xf32>
    %76 = arith.mulf %75, %24 : vector<8x8x32xf32>
    %cst_31 = arith.constant dense<0.000000e+00> : vector<8x8xf32>
    %77 = vector.multi_reduction <add>, %76, %cst_31 [2] : vector<8x8x32xf32> to vector<8x8xf32>
    %c1_32 = arith.constant 1 : index
    %c1_33 = arith.constant 1 : index
    %78 = vector.load %arg3[%c1_32, %c1_33] : memref<8x256xf32, #tpu.memory_space<vmem>>, vector<1x1xf32>
    %79 = vector.broadcast %78 : vector<1x1xf32> to vector<8x8xf32>
    %80 = arith.addf %77, %79 : vector<8x8xf32>
    %c0_34 = arith.constant 0 : index
    %c40 = arith.constant 40 : index
    %81 = vector.load %arg4[%c0_34, %c40] : memref<8x256xf32, #tpu.memory_space<vmem>>, vector<8x8xf32>
    tpu.vector_store %arg4[%c0_34, %c40], %80 {strides = array<i32>} : memref<8x256xf32, #tpu.memory_space<vmem>>, vector<8x8xf32>,
    %82 = vector.extract_strided_slice %9 {offsets = [0, 0, 3], sizes = [8, 8, 1], strides = [1, 1, 1]} : vector<8x8x4xf32> to vector<8x8x1xf32>
    %83 = vector.broadcast %82 : vector<8x8x1xf32> to vector<8x8x32xf32>
    %84 = arith.mulf %83, %7 : vector<8x8x32xf32>
    %cst_35 = arith.constant dense<0.000000e+00> : vector<8x32xf32>
    %85 = vector.multi_reduction <add>, %84, %cst_35 [1] : vector<8x8x32xf32> to vector<8x32xf32>
    %86 = vector.shape_cast %85 : vector<8x32xf32> to vector<8x1x32xf32>
    %87 = vector.broadcast %86 : vector<8x1x32xf32> to vector<8x8x32xf32>
    %88 = arith.mulf %87, %20 : vector<8x8x32xf32>
    %cst_36 = arith.constant dense<0.000000e+00> : vector<8x8xf32>
    %89 = vector.multi_reduction <add>, %88, %cst_36 [2] : vector<8x8x32xf32> to vector<8x8xf32>
    %c1_37 = arith.constant 1 : index
    %c0_38 = arith.constant 0 : index
    %90 = vector.load %arg3[%c1_37, %c0_38] : memref<8x256xf32, #tpu.memory_space<vmem>>, vector<1x1xf32>
    %91 = vector.broadcast %90 : vector<1x1xf32> to vector<8x8xf32>
    %92 = arith.addf %89, %91 : vector<8x8xf32>
    %c0_39 = arith.constant 0 : index
    %c48 = arith.constant 48 : index
    %93 = vector.load %arg4[%c0_39, %c48] : memref<8x256xf32, #tpu.memory_space<vmem>>, vector<8x8xf32>
    tpu.vector_store %arg4[%c0_39, %c48], %92 {strides = array<i32>} : memref<8x256xf32, #tpu.memory_space<vmem>>, vector<8x8xf32>,
    %94 = vector.broadcast %86 : vector<8x1x32xf32> to vector<8x8x32xf32>
    %95 = arith.mulf %94, %24 : vector<8x8x32xf32>
    %cst_40 = arith.constant dense<0.000000e+00> : vector<8x8xf32>
    %96 = vector.multi_reduction <add>, %95, %cst_40 [2] : vector<8x8x32xf32> to vector<8x8xf32>
    %c1_41 = arith.constant 1 : index
    %c1_42 = arith.constant 1 : index
    %97 = vector.load %arg3[%c1_41, %c1_42] : memref<8x256xf32, #tpu.memory_space<vmem>>, vector<1x1xf32>
    %98 = vector.broadcast %97 : vector<1x1xf32> to vector<8x8xf32>
    %99 = arith.addf %96, %98 : vector<8x8xf32>
    %c0_43 = arith.constant 0 : index
    %c56 = arith.constant 56 : index
    %100 = vector.load %arg4[%c0_43, %c56] : memref<8x256xf32, #tpu.memory_space<vmem>>, vector<8x8xf32>
    tpu.vector_store %arg4[%c0_43, %c56], %99 {strides = array<i32>} : memref<8x256xf32, #tpu.memory_space<vmem>>, vector<8x8xf32>,
    %101 = vector.shape_cast %9 : vector<8x8x4xf32> to vector<8x32xf32>
    %c0_44 = arith.constant 0 : index
    %c64 = arith.constant 64 : index
    %102 = vector.load %arg4[%c0_44, %c64] : memref<8x256xf32, #tpu.memory_space<vmem>>, vector<8x32xf32>
    tpu.vector_store %arg4[%c0_44, %c64], %101 {strides = array<i32>} : memref<8x256xf32, #tpu.memory_space<vmem>>, vector<8x32xf32>,
    %103 = vector.shape_cast %10 : vector<8x8x8xf32> to vector<8x64xf32>
    %c0_45 = arith.constant 0 : index
    %c96 = arith.constant 96 : index
    %104 = vector.load %arg4[%c0_45, %c96] : memref<8x256xf32, #tpu.memory_space<vmem>>, vector<8x64xf32>
    tpu.vector_store %arg4[%c0_45, %c96], %103 {strides = array<i32>} : memref<8x256xf32, #tpu.memory_space<vmem>>, vector<8x64xf32>,
    %cst_46 = arith.constant 0.000000e+00 : f32
    %105 = vector.broadcast %cst_46 : f32 to vector<8x96xf32>
    %c0_47 = arith.constant 0 : index
    %c160 = arith.constant 160 : index
    %106 = vector.load %arg4[%c0_47, %c160] : memref<8x256xf32, #tpu.memory_space<vmem>>, vector<8x96xf32>
    tpu.vector_store %arg4[%c0_47, %c160], %105 {strides = array<i32>} : memref<8x256xf32, #tpu.memory_space<vmem>>, vector<8x96xf32>,
    return
  }
  func.func @transform_0(%arg0: i32) -> (i32, i32) {
    %c0_i32 = arith.constant 0 : i32
    %c0_i32_0 = arith.constant 0 : i32
    return %arg0, %c0_i32 : i32, i32
  }
  func.func @transform_1(%arg0: i32) -> (i32, i32) {
    %c0_i32 = arith.constant 0 : i32
    %c0_i32_0 = arith.constant 0 : i32
    %c0_i32_1 = arith.constant 0 : i32
    return %c0_i32, %c0_i32_0 : i32, i32
  }
  func.func @transform_2(%arg0: i32) -> (i32, i32) {
    %c0_i32 = arith.constant 0 : i32
    %c0_i32_0 = arith.constant 0 : i32
    %c0_i32_1 = arith.constant 0 : i32
    return %c0_i32, %c0_i32_0 : i32, i32
  }
  func.func @transform_3(%arg0: i32) -> (i32, i32) {
    %c0_i32 = arith.constant 0 : i32
    %c0_i32_0 = arith.constant 0 : i32
    return %arg0, %c0_i32 : i32, i32
  }
}

</mosaic_0001>

<llo_original>
// kernel: tpu_custom_call.1
$region0: #{tpu_custom_call.1}
  #allocation0 [shape = 'u32[]', space=smem, size = 0x4, offset = 0x4, fixed_abs, tag = 'smem constant byte address 0x4 - core index']
  #allocation1 [shape = 'u32[72,128]{1,0:T(1,128)}', space=vmem, size = 0x9000, scoped, tag = 'internal scratch']
  %s0 = inlined_call_operand.vmem [shape: f32[64,32], index: 0, kind: input, shape index: {}]
  %s1 = inlined_call_operand.vmem [shape: f32[32,16], index: 1, kind: input, shape index: {}]
  %s2 = inlined_call_operand.vmem [shape: f32[8,256], index: 2, kind: input, shape index: {}]
  %s3 = inlined_call_operand.hbm [shape: f32[8,256], index: 3, kind: output, shape index: {}]
  %s4 = sld [smem:[#allocation0]]
  $region22: #{tpu_custom_call.1} parent=0
    _
  %s6 = ssub.s32 1, %s4
  %s7 = scalar_select 0, %s6, %s4
  $region1: #{tpu_custom_call.1} parent=0
    #allocation2 [shape = 'u8[8192]{0}', space=vmem, size = 0x2000, scoped, tag = 'output window, operand 0, single buffered']
    #allocation3 [shape = 's32[1]{0}', space=sflag, size = 0x4, scoped, tag = 'scoped memory for tpu_custom_call.1']
    %8 = vsyncpa [#allocation3], 0
    // Predicated region
    $region2: #{tpu_custom_call.1} parent=1 // pred_check
      _
    $region3: #{tpu_custom_call.1} parent=1 // pred_check_branch
      %10 = sbr.rel (0) target = $region5
    $region4: #{tpu_custom_call.1} parent=1 // pred_region
      _
    $region5: #{tpu_custom_call.1} parent=1 // pred_fallthru
      _
    // Predicated region
    $region6: #{tpu_custom_call.1} parent=1 // pred_check
      _
    $region7: #{tpu_custom_call.1} parent=1 // pred_check_branch
      %12 = sbr.rel (0) target = $region9
    $region8: #{tpu_custom_call.1} parent=1 // pred_region
      _
    $region9: #{tpu_custom_call.1} parent=1 // pred_fallthru
      _
    // Predicated region
    $region10: #{tpu_custom_call.1} parent=1 // pred_check
      _
    $region11: #{tpu_custom_call.1} parent=1 // pred_check_branch
      %14 = sbr.rel (0) target = $region13
    $region12: #{tpu_custom_call.1} parent=1 // pred_region
      _
    $region13: #{tpu_custom_call.1} parent=1 // pred_fallthru
      _
    %v15 = vld [vmem:[%s0] sm:$0xff]
    %v16 = vld [vmem:[%s0 + $0x8] sm:$0xff]
    %v17 = vld [vmem:[%s0 + $0x10] sm:$0xff]
    %v18 = vld [vmem:[%s0 + $0x18] sm:$0xff]
    %v19 = vld [vmem:[%s0 + $0x20] sm:$0xff]
    %v20 = vld [vmem:[%s0 + $0x28] sm:$0xff]
    %v21 = vld [vmem:[%s0 + $0x30] sm:$0xff]
    %v22 = vld [vmem:[%s0 + $0x38] sm:$0xff]
    %v23 = vld [vmem:[%s1] sm:$0xff]
    %v24 = vld [vmem:[%s1 + $0x8] sm:$0xff]
    %v25 = vld [vmem:[%s1 + $0x10] sm:$0xff]
    %v26 = vld [vmem:[%s1 + $0x18] sm:$0xff]
    %v27 = vld [vmem:[%s2] ss:$0 sm:$0xff]
    %vm28 = vcmask 261120
    %v30 = vsel %vm28, %v15, 0
    %v33 = vsel %vm28, %v16, 0
    %v36 = vsel %vm28, %v17, 0
    %v39 = vsel %vm28, %v18, 0
    %v42 = vsel %vm28, %v19, 0
    %v45 = vsel %vm28, %v20, 0
    %v48 = vsel %vm28, %v21, 0
    %v51 = vsel %vm28, %v22, 0
    %53 = vmatpush.msra.mxu0 0.0
    %54 = vmatpush.msra.mxu0 0.0
    %55 = vmatpush.msra.mxu0 0.0
    %56 = vmatpush.msra.mxu0 0.0
    %57 = vmatpush.msra.mxu0 0.0
    %58 = vmatpush.msra.mxu0 0.0
    %59 = vmatpush.msra.mxu0 0.0
    %60 = vmatpush.msra.mxu0 0.0
    %61 = vmatpush.msra.mxu0 0.0
    %62 = vmatpush.msra.mxu0 0.0
    %63 = vmatpush.msra.mxu0 0.0
    %64 = vmatpush.msra.mxu0 0.0
    %65 = vmatpush.msra.mxu0 %v26
    %66 = vmatpush.msra.mxu0 %v25
    %67 = vmatpush.msra.mxu0 %v24
    %68 = vmatpush.msra.mxu0 %v23
    %69 = vmatmul.f32.gmra.mxu0 %v30
    %v70 = vpop.f32.mrf.mxu0
    %v71 = vadd.f32 %v27, %v70
    %72 = vmatmul.f32.gmra.mxu0 %v33
    %v73 = vpop.f32.mrf.mxu0
    %v74 = vadd.f32 %v27, %v73
    %75 = vmatmul.f32.gmra.mxu0 %v36
    %v76 = vpop.f32.mrf.mxu0
    %v77 = vadd.f32 %v27, %v76
    %78 = vmatmul.f32.gmra.mxu0 %v39
    %v79 = vpop.f32.mrf.mxu0
    %v80 = vadd.f32 %v27, %v79
    %81 = vmatmul.f32.gmra.mxu0 %v42
    %v82 = vpop.f32.mrf.mxu0
    %v83 = vadd.f32 %v27, %v82
    %84 = vmatmul.f32.gmra.mxu0 %v45
    %v85 = vpop.f32.mrf.mxu0
    %v86 = vadd.f32 %v27, %v85
    %87 = vmatmul.f32.gmra.mxu0 %v48
    %v88 = vpop.f32.mrf.mxu0
    %v89 = vadd.f32 %v27, %v88
    %90 = vmatmul.f32.gmra.mxu0 %v51
    %v91 = vpop.f32.mrf.mxu0
    %v92 = vadd.f32 %v27, %v91
    %93 = vdwg.mxu0
    %v94 = vtanh.pop %v71
    %v95 = vtanh.pop %v74
    %v96 = vtanh.pop %v77
    %v97 = vtanh.pop %v80
    %v98 = vtanh.pop %v83
    %v99 = vtanh.pop %v86
    %v100 = vtanh.pop %v89
    %v101 = vtanh.pop %v92
    %v102 = vperm.slane %v94, 0
    %v103 = vlaneseq
    %v104 = vshrl.u32 %v103, 7
    %v105 = vadd.s32 %v104, 4
    %106 = vset.pattern.permute.xlu0 %v105
    %107 = vperm.xlu0 %106, %v102
    %v108 = vpop.permute.xlu0 %107
    %v109 = vperm.slane %v94, 1
    %v110 = vlaneseq
    %v111 = vshrl.u32 %v110, 7
    %v112 = vadd.s32 %v111, 4
    %113 = vset.pattern.permute.xlu0 %v112
    %114 = vperm.xlu0 %113, %v109
    %v115 = vpop.permute.xlu0 %114
    %v116 = vperm.slane %v94, 2
    %v117 = vlaneseq
    %v118 = vshrl.u32 %v117, 7
    %v119 = vadd.s32 %v118, 4
    %120 = vset.pattern.permute.xlu0 %v119
    %121 = vperm.xlu0 %120, %v116
    %v122 = vpop.permute.xlu0 %121
    %v123 = vperm.slane %v94, 3
    %v124 = vlaneseq
    %v125 = vshrl.u32 %v124, 7
    %v126 = vadd.s32 %v125, 4
    %127 = vset.pattern.permute.xlu0 %v126
    %128 = vperm.xlu0 %127, %v123
    %v129 = vpop.permute.xlu0 %128
    %v130 = vperm.slane %v94, 4
    %v131 = vlaneseq
    %v132 = vshrl.u32 %v131, 7
    %v133 = vadd.s32 %v132, 4
    %134 = vset.pattern.permute.xlu0 %v133
    %135 = vperm.xlu0 %134, %v130
    %v136 = vpop.permute.xlu0 %135
    %v137 = vperm.slane %v94, 5
    %v138 = vlaneseq
    %v139 = vshrl.u32 %v138, 7
    %v140 = vadd.s32 %v139, 4
    %141 = vset.pattern.permute.xlu0 %v140
    %142 = vperm.xlu0 %141, %v137
    %v143 = vpop.permute.xlu0 %142
    %v144 = vperm.slane %v94, 6
    %v145 = vlaneseq
    %v146 = vshrl.u32 %v145, 7
    %v147 = vadd.s32 %v146, 4
    %148 = vset.pattern.permute.xlu0 %v147
    %149 = vperm.xlu0 %148, %v144
    %v150 = vpop.permute.xlu0 %149
    %v151 = vperm.slane %v94, 7
    %v152 = vlaneseq
    %v153 = vshrl.u32 %v152, 7
    %v154 = vadd.s32 %v153, 4
    %155 = vset.pattern.permute.xlu0 %v154
    %156 = vperm.xlu0 %155, %v151
    %v157 = vpop.permute.xlu0 %156
    %v158 = vperm.slane %v95, 0
    %v159 = vlaneseq
    %v160 = vshrl.u32 %v159, 7
    %v161 = vadd.s32 %v160, 4
    %162 = vset.pattern.permute.xlu0 %v161
    %163 = vperm.xlu0 %162, %v158
    %v164 = vpop.permute.xlu0 %163
    %v165 = vperm.slane %v95, 1
    %v166 = vlaneseq
    %v167 = vshrl.u32 %v166, 7
    %v168 = vadd.s32 %v167, 4
    %169 = vset.pattern.permute.xlu0 %v168
    %170 = vperm.xlu0 %169, %v165
    %v171 = vpop.permute.xlu0 %170
    %v172 = vperm.slane %v95, 2
    %v173 = vlaneseq
    %v174 = vshrl.u32 %v173, 7
    %v175 = vadd.s32 %v174, 4
    %176 = vset.pattern.permute.xlu0 %v175
    %177 = vperm.xlu0 %176, %v172
    %v178 = vpop.permute.xlu0 %177
    %v179 = vperm.slane %v95, 3
    %v180 = vlaneseq
    %v181 = vshrl.u32 %v180, 7
    %v182 = vadd.s32 %v181, 4
    %183 = vset.pattern.permute.xlu0 %v182
    %184 = vperm.xlu0 %183, %v179
    %v185 = vpop.permute.xlu0 %184
    %v186 = vperm.slane %v95, 4
    %v187 = vlaneseq
    %v188 = vshrl.u32 %v187, 7
    %v189 = vadd.s32 %v188, 4
    %190 = vset.pattern.permute.xlu0 %v189
    %191 = vperm.xlu0 %190, %v186
    %v192 = vpop.permute.xlu0 %191
    %v193 = vperm.slane %v95, 5
    %v194 = vlaneseq
    %v195 = vshrl.u32 %v194, 7
    %v196 = vadd.s32 %v195, 4
    %197 = vset.pattern.permute.xlu0 %v196
    %198 = vperm.xlu0 %197, %v193
    %v199 = vpop.permute.xlu0 %198
    %v200 = vperm.slane %v95, 6
    %v201 = vlaneseq
    %v202 = vshrl.u32 %v201, 7
    %v203 = vadd.s32 %v202, 4
    %204 = vset.pattern.permute.xlu0 %v203
    %205 = vperm.xlu0 %204, %v200
    %v206 = vpop.permute.xlu0 %205
    %v207 = vperm.slane %v95, 7
    %v208 = vlaneseq
    %v209 = vshrl.u32 %v208, 7
    %v210 = vadd.s32 %v209, 4
    %211 = vset.pattern.permute.xlu0 %v210
    %212 = vperm.xlu0 %211, %v207
    %v213 = vpop.permute.xlu0 %212
    %v214 = vperm.slane %v96, 0
    %v215 = vlaneseq
    %v216 = vshrl.u32 %v215, 7
    %v217 = vadd.s32 %v216, 4
    %218 = vset.pattern.permute.xlu0 %v217
    %219 = vperm.xlu0 %218, %v214
    %v220 = vpop.permute.xlu0 %219
    %v221 = vperm.slane %v96, 1
    %v222 = vlaneseq
    %v223 = vshrl.u32 %v222, 7
    %v224 = vadd.s32 %v223, 4
    %225 = vset.pattern.permute.xlu0 %v224
    %226 = vperm.xlu0 %225, %v221
    %v227 = vpop.permute.xlu0 %226
    %v228 = vperm.slane %v96, 2
    %v229 = vlaneseq
    %v230 = vshrl.u32 %v229, 7
    %v231 = vadd.s32 %v230, 4
    %232 = vset.pattern.permute.xlu0 %v231
    %233 = vperm.xlu0 %232, %v228
    %v234 = vpop.permute.xlu0 %233
    %v235 = vperm.slane %v96, 3
    %v236 = vlaneseq
    %v237 = vshrl.u32 %v236, 7
    %v238 = vadd.s32 %v237, 4
    %239 = vset.pattern.permute.xlu0 %v238
    %240 = vperm.xlu0 %239, %v235
    %v241 = vpop.permute.xlu0 %240
    %v242 = vperm.slane %v96, 4
    %v243 = vlaneseq
    %v244 = vshrl.u32 %v243, 7
    %v245 = vadd.s32 %v244, 4
    %246 = vset.pattern.permute.xlu0 %v245
    %247 = vperm.xlu0 %246, %v242
    %v248 = vpop.permute.xlu0 %247
    %v249 = vperm.slane %v96, 5
    %v250 = vlaneseq
    %v251 = vshrl.u32 %v250, 7
    %v252 = vadd.s32 %v251, 4
    %253 = vset.pattern.permute.xlu0 %v252
    %254 = vperm.xlu0 %253, %v249
    %v255 = vpop.permute.xlu0 %254
    %v256 = vperm.slane %v96, 6
    %v257 = vlaneseq
    %v258 = vshrl.u32 %v257, 7
    %v259 = vadd.s32 %v258, 4
    %260 = vset.pattern.permute.xlu0 %v259
    %261 = vperm.xlu0 %260, %v256
    %v262 = vpop.permute.xlu0 %261
    %v263 = vperm.slane %v96, 7
    %v264 = vlaneseq
    %v265 = vshrl.u32 %v264, 7
    %v266 = vadd.s32 %v265, 4
    %267 = vset.pattern.permute.xlu0 %v266
    %268 = vperm.xlu0 %267, %v263
    %v269 = vpop.permute.xlu0 %268
    %v270 = vperm.slane %v97, 0
    %v271 = vlaneseq
    %v272 = vshrl.u32 %v271, 7
    %v273 = vadd.s32 %v272, 4
    %274 = vset.pattern.permute.xlu0 %v273
    %275 = vperm.xlu0 %274, %v270
    %v276 = vpop.permute.xlu0 %275
    %v277 = vperm.slane %v97, 1
    %v278 = vlaneseq
    %v279 = vshrl.u32 %v278, 7
    %v280 = vadd.s32 %v279, 4
    %281 = vset.pattern.permute.xlu0 %v280
    %282 = vperm.xlu0 %281, %v277
    %v283 = vpop.permute.xlu0 %282
    %v284 = vperm.slane %v97, 2
    %v285 = vlaneseq
    %v286 = vshrl.u32 %v285, 7
    %v287 = vadd.s32 %v286, 4
    %288 = vset.pattern.permute.xlu0 %v287
    %289 = vperm.xlu0 %288, %v284
    %v290 = vpop.permute.xlu0 %289
    %v291 = vperm.slane %v97, 3
    %v292 = vlaneseq
    %v293 = vshrl.u32 %v292, 7
    %v294 = vadd.s32 %v293, 4
    %295 = vset.pattern.permute.xlu0 %v294
    %296 = vperm.xlu0 %295, %v291
    %v297 = vpop.permute.xlu0 %296
    %v298 = vperm.slane %v97, 4
    %v299 = vlaneseq
    %v300 = vshrl.u32 %v299, 7
    %v301 = vadd.s32 %v300, 4
    %302 = vset.pattern.permute.xlu0 %v301
    %303 = vperm.xlu0 %302, %v298
    %v304 = vpop.permute.xlu0 %303
    %v305 = vperm.slane %v97, 5
    %v306 = vlaneseq
    %v307 = vshrl.u32 %v306, 7
    %v308 = vadd.s32 %v307, 4
    %309 = vset.pattern.permute.xlu0 %v308
    %310 = vperm.xlu0 %309, %v305
    %v311 = vpop.permute.xlu0 %310
    %v312 = vperm.slane %v97, 6
    %v313 = vlaneseq
    %v314 = vshrl.u32 %v313, 7
    %v315 = vadd.s32 %v314, 4
    %316 = vset.pattern.permute.xlu0 %v315
    %317 = vperm.xlu0 %316, %v312
    %v318 = vpop.permute.xlu0 %317
    %v319 = vperm.slane %v97, 7
    %v320 = vlaneseq
    %v321 = vshrl.u32 %v320, 7
    %v322 = vadd.s32 %v321, 4
    %323 = vset.pattern.permute.xlu0 %v322
    %324 = vperm.xlu0 %323, %v319
    %v325 = vpop.permute.xlu0 %324
    %v326 = vperm.slane %v98, 0
    %v327 = vlaneseq
    %v328 = vshrl.u32 %v327, 7
    %v329 = vadd.s32 %v328, 4
    %330 = vset.pattern.permute.xlu0 %v329
    %331 = vperm.xlu0 %330, %v326
    %v332 = vpop.permute.xlu0 %331
    %v333 = vperm.slane %v98, 1
    %v334 = vlaneseq
    %v335 = vshrl.u32 %v334, 7
    %v336 = vadd.s32 %v335, 4
    %337 = vset.pattern.permute.xlu0 %v336
    %338 = vperm.xlu0 %337, %v333
    %v339 = vpop.permute.xlu0 %338
    %v340 = vperm.slane %v98, 2
    %v341 = vlaneseq
    %v342 = vshrl.u32 %v341, 7
    %v343 = vadd.s32 %v342, 4
    %344 = vset.pattern.permute.xlu0 %v343
    %345 = vperm.xlu0 %344, %v340
    %v346 = vpop.permute.xlu0 %345
    %v347 = vperm.slane %v98, 3
    %v348 = vlaneseq
    %v349 = vshrl.u32 %v348, 7
    %v350 = vadd.s32 %v349, 4
    %351 = vset.pattern.permute.xlu0 %v350
    %352 = vperm.xlu0 %351, %v347
    %v353 = vpop.permute.xlu0 %352
    %v354 = vperm.slane %v98, 4
    %v355 = vlaneseq
    %v356 = vshrl.u32 %v355, 7
    %v357 = vadd.s32 %v356, 4
    %358 = vset.pattern.permute.xlu0 %v357
    %359 = vperm.xlu0 %358, %v354
    %v360 = vpop.permute.xlu0 %359
    %v361 = vperm.slane %v98, 5
    %v362 = vlaneseq
    %v363 = vshrl.u32 %v362, 7
    %v364 = vadd.s32 %v363, 4
    %365 = vset.pattern.permute.xlu0 %v364
    %366 = vperm.xlu0 %365, %v361
    %v367 = vpop.permute.xlu0 %366
    %v368 = vperm.slane %v98, 6
    %v369 = vlaneseq
    %v370 = vshrl.u32 %v369, 7
    %v371 = vadd.s32 %v370, 4
    %372 = vset.pattern.permute.xlu0 %v371
    %373 = vperm.xlu0 %372, %v368
    %v374 = vpop.permute.xlu0 %373
    %v375 = vperm.slane %v98, 7
    %v376 = vlaneseq
    %v377 = vshrl.u32 %v376, 7
    %v378 = vadd.s32 %v377, 4
    %379 = vset.pattern.permute.xlu0 %v378
    %380 = vperm.xlu0 %379, %v375
    %v381 = vpop.permute.xlu0 %380
    %v382 = vperm.slane %v99, 0
    %v383 = vlaneseq
    %v384 = vshrl.u32 %v383, 7
    %v385 = vadd.s32 %v384, 4
    %386 = vset.pattern.permute.xlu0 %v385
    %387 = vperm.xlu0 %386, %v382
    %v388 = vpop.permute.xlu0 %387
    %v389 = vperm.slane %v99, 1
    %v390 = vlaneseq
    %v391 = vshrl.u32 %v390, 7
    %v392 = vadd.s32 %v391, 4
    %393 = vset.pattern.permute.xlu0 %v392
    %394 = vperm.xlu0 %393, %v389
    %v395 = vpop.permute.xlu0 %394
    %v396 = vperm.slane %v99, 2
    %v397 = vlaneseq
    %v398 = vshrl.u32 %v397, 7
    %v399 = vadd.s32 %v398, 4
    %400 = vset.pattern.permute.xlu0 %v399
    %401 = vperm.xlu0 %400, %v396
    %v402 = vpop.permute.xlu0 %401
    %v403 = vperm.slane %v99, 3
    %v404 = vlaneseq
    %v405 = vshrl.u32 %v404, 7
    %v406 = vadd.s32 %v405, 4
    %407 = vset.pattern.permute.xlu0 %v406
    %408 = vperm.xlu0 %407, %v403
    %v409 = vpop.permute.xlu0 %408
    %v410 = vperm.slane %v99, 4
    %v411 = vlaneseq
    %v412 = vshrl.u32 %v411, 7
    %v413 = vadd.s32 %v412, 4
    %414 = vset.pattern.permute.xlu0 %v413
    %415 = vperm.xlu0 %414, %v410
    %v416 = vpop.permute.xlu0 %415
    %v417 = vperm.slane %v99, 5
    %v418 = vlaneseq
    %v419 = vshrl.u32 %v418, 7
    %v420 = vadd.s32 %v419, 4
    %421 = vset.pattern.permute.xlu0 %v420
    %422 = vperm.xlu0 %421, %v417
    %v423 = vpop.permute.xlu0 %422
    %v424 = vperm.slane %v99, 6
    %v425 = vlaneseq
    %v426 = vshrl.u32 %v425, 7
    %v427 = vadd.s32 %v426, 4
    %428 = vset.pattern.permute.xlu0 %v427
    %429 = vperm.xlu0 %428, %v424
    %v430 = vpop.permute.xlu0 %429
    %v431 = vperm.slane %v99, 7
    %v432 = vlaneseq
    %v433 = vshrl.u32 %v432, 7
    %v434 = vadd.s32 %v433, 4
    %435 = vset.pattern.permute.xlu0 %v434
    %436 = vperm.xlu0 %435, %v431
    %v437 = vpop.permute.xlu0 %436
    %v438 = vperm.slane %v100, 0
    %v439 = vlaneseq
    %v440 = vshrl.u32 %v439, 7
    %v441 = vadd.s32 %v440, 4
    %442 = vset.pattern.permute.xlu0 %v441
    %443 = vperm.xlu0 %442, %v438
    %v444 = vpop.permute.xlu0 %443
    %v445 = vperm.slane %v100, 1
    %v446 = vlaneseq
    %v447 = vshrl.u32 %v446, 7
    %v448 = vadd.s32 %v447, 4
    %449 = vset.pattern.permute.xlu0 %v448
    %450 = vperm.xlu0 %449, %v445
    %v451 = vpop.permute.xlu0 %450
    %v452 = vperm.slane %v100, 2
    %v453 = vlaneseq
    %v454 = vshrl.u32 %v453, 7
    %v455 = vadd.s32 %v454, 4
    %456 = vset.pattern.permute.xlu0 %v455
    %457 = vperm.xlu0 %456, %v452
    %v458 = vpop.permute.xlu0 %457
    %v459 = vperm.slane %v100, 3
    %v460 = vlaneseq
    %v461 = vshrl.u32 %v460, 7
    %v462 = vadd.s32 %v461, 4
    %463 = vset.pattern.permute.xlu0 %v462
    %464 = vperm.xlu0 %463, %v459
    %v465 = vpop.permute.xlu0 %464
    %v466 = vperm.slane %v100, 4
    %v467 = vlaneseq
    %v468 = vshrl.u32 %v467, 7
    %v469 = vadd.s32 %v468, 4
    %470 = vset.pattern.permute.xlu0 %v469
    %471 = vperm.xlu0 %470, %v466
    %v472 = vpop.permute.xlu0 %471
    %v473 = vperm.slane %v100, 5
    %v474 = vlaneseq
    %v475 = vshrl.u32 %v474, 7
    %v476 = vadd.s32 %v475, 4
    %477 = vset.pattern.permute.xlu0 %v476
    %478 = vperm.xlu0 %477, %v473
    %v479 = vpop.permute.xlu0 %478
    %v480 = vperm.slane %v100, 6
    %v481 = vlaneseq
    %v482 = vshrl.u32 %v481, 7
    %v483 = vadd.s32 %v482, 4
    %484 = vset.pattern.permute.xlu0 %v483
    %485 = vperm.xlu0 %484, %v480
    %v486 = vpop.permute.xlu0 %485
    %v487 = vperm.slane %v100, 7
    %v488 = vlaneseq
    %v489 = vshrl.u32 %v488, 7
    %v490 = vadd.s32 %v489, 4
    %491 = vset.pattern.permute.xlu0 %v490
    %492 = vperm.xlu0 %491, %v487
    %v493 = vpop.permute.xlu0 %492
    %v494 = vperm.slane %v101, 0
    %v495 = vlaneseq
    %v496 = vshrl.u32 %v495, 7
    %v497 = vadd.s32 %v496, 4
    %498 = vset.pattern.permute.xlu0 %v497
    %499 = vperm.xlu0 %498, %v494
    %v500 = vpop.permute.xlu0 %499
    %v501 = vperm.slane %v101, 1
    %v502 = vlaneseq
    %v503 = vshrl.u32 %v502, 7
    %v504 = vadd.s32 %v503, 4
    %505 = vset.pattern.permute.xlu0 %v504
    %506 = vperm.xlu0 %505, %v501
    %v507 = vpop.permute.xlu0 %506
    %v508 = vperm.slane %v101, 2
    %v509 = vlaneseq
    %v510 = vshrl.u32 %v509, 7
    %v511 = vadd.s32 %v510, 4
    %512 = vset.pattern.permute.xlu0 %v511
    %513 = vperm.xlu0 %512, %v508
    %v514 = vpop.permute.xlu0 %513
    %v515 = vperm.slane %v101, 3
    %v516 = vlaneseq
    %v517 = vshrl.u32 %v516, 7
    %v518 = vadd.s32 %v517, 4
    %519 = vset.pattern.permute.xlu0 %v518
    %520 = vperm.xlu0 %519, %v515
    %v521 = vpop.permute.xlu0 %520
    %v522 = vperm.slane %v101, 4
    %v523 = vlaneseq
    %v524 = vshrl.u32 %v523, 7
    %v525 = vadd.s32 %v524, 4
    %526 = vset.pattern.permute.xlu0 %v525
    %527 = vperm.xlu0 %526, %v522
    %v528 = vpop.permute.xlu0 %527
    %v529 = vperm.slane %v101, 5
    %v530 = vlaneseq
    %v531 = vshrl.u32 %v530, 7
    %v532 = vadd.s32 %v531, 4
    %533 = vset.pattern.permute.xlu0 %v532
    %534 = vperm.xlu0 %533, %v529
    %v535 = vpop.permute.xlu0 %534
    %v536 = vperm.slane %v101, 6
    %v537 = vlaneseq
    %v538 = vshrl.u32 %v537, 7
    %v539 = vadd.s32 %v538, 4
    %540 = vset.pattern.permute.xlu0 %v539
    %541 = vperm.xlu0 %540, %v536
    %v542 = vpop.permute.xlu0 %541
    %v543 = vperm.slane %v101, 7
    %v544 = vlaneseq
    %v545 = vshrl.u32 %v544, 7
    %v546 = vadd.s32 %v545, 4
    %547 = vset.pattern.permute.xlu0 %v546
    %548 = vperm.xlu0 %547, %v543
    %v549 = vpop.permute.xlu0 %548
    %v550 = vrot.slane %v15, 1
    %v551 = vrot.slane %v15, 2
    %v552 = vrot.slane %v15, 3
    %v553 = vrot.slane %v15, 4
    %v554 = vrot.slane %v15, 5
    %v555 = vrot.slane %v15, 6
    %v556 = vrot.slane %v15, 7
    %v557 = vrot.slane %v16, 1
    %v558 = vrot.slane %v16, 2
    %v559 = vrot.slane %v16, 3
    %v560 = vrot.slane %v16, 4
    %v561 = vrot.slane %v16, 5
    %v562 = vrot.slane %v16, 6
    %v563 = vrot.slane %v16, 7
    %v564 = vrot.slane %v17, 1
    %v565 = vrot.slane %v17, 2
    %v566 = vrot.slane %v17, 3
    %v567 = vrot.slane %v17, 4
    %v568 = vrot.slane %v17, 5
    %v569 = vrot.slane %v17, 6
    %v570 = vrot.slane %v17, 7
    %v571 = vrot.slane %v18, 1
    %v572 = vrot.slane %v18, 2
    %v573 = vrot.slane %v18, 3
    %v574 = vrot.slane %v18, 4
    %v575 = vrot.slane %v18, 5
    %v576 = vrot.slane %v18, 6
    %v577 = vrot.slane %v18, 7
    %v578 = vrot.slane %v19, 1
    %v579 = vrot.slane %v19, 2
    %v580 = vrot.slane %v19, 3
    %v581 = vrot.slane %v19, 4
    %v582 = vrot.slane %v19, 5
    %v583 = vrot.slane %v19, 6
    %v584 = vrot.slane %v19, 7
    %v585 = vrot.slane %v20, 1
    %v586 = vrot.slane %v20, 2
    %v587 = vrot.slane %v20, 3
    %v588 = vrot.slane %v20, 4
    %v589 = vrot.slane %v20, 5
    %v590 = vrot.slane %v20, 6
    %v591 = vrot.slane %v20, 7
    %v592 = vrot.slane %v21, 1
    %v593 = vrot.slane %v21, 2
    %v594 = vrot.slane %v21, 3
    %v595 = vrot.slane %v21, 4
    %v596 = vrot.slane %v21, 5
    %v597 = vrot.slane %v21, 6
    %v598 = vrot.slane %v21, 7
    %v599 = vrot.slane %v22, 1
    %v600 = vrot.slane %v22, 2
    %v601 = vrot.slane %v22, 3
    %v602 = vrot.slane %v22, 4
    %v603 = vrot.slane %v22, 5
    %v604 = vrot.slane %v22, 6
    %v605 = vrot.slane %v22, 7
    %v606 = vperm.slane %v15, 0
    %v607 = vperm.slane %v550, 0
    %v608 = vperm.slane %v551, 0
    %v609 = vperm.slane %v552, 0
    %v610 = vperm.slane %v553, 0
    %v611 = vperm.slane %v554, 0
    %v612 = vperm.slane %v555, 0
    %v613 = vperm.slane %v556, 0
    %v614 = vperm.slane %v16, 0
    %v615 = vperm.slane %v557, 0
    %v616 = vperm.slane %v558, 0
    %v617 = vperm.slane %v559, 0
    %v618 = vperm.slane %v560, 0
    %v619 = vperm.slane %v561, 0
    %v620 = vperm.slane %v562, 0
    %v621 = vperm.slane %v563, 0
    %v622 = vperm.slane %v17, 0
    %v623 = vperm.slane %v564, 0
    %v624 = vperm.slane %v565, 0
    %v625 = vperm.slane %v566, 0
    %v626 = vperm.slane %v567, 0
    %v627 = vperm.slane %v568, 0
    %v628 = vperm.slane %v569, 0
    %v629 = vperm.slane %v570, 0
    %v630 = vperm.slane %v18, 0
    %v631 = vperm.slane %v571, 0
    %v632 = vperm.slane %v572, 0
    %v633 = vperm.slane %v573, 0
    %v634 = vperm.slane %v574, 0
    %v635 = vperm.slane %v575, 0
    %v636 = vperm.slane %v576, 0
    %v637 = vperm.slane %v577, 0
    %v638 = vperm.slane %v19, 0
    %v639 = vperm.slane %v578, 0
    %v640 = vperm.slane %v579, 0
    %v641 = vperm.slane %v580, 0
    %v642 = vperm.slane %v581, 0
    %v643 = vperm.slane %v582, 0
    %v644 = vperm.slane %v583, 0
    %v645 = vperm.slane %v584, 0
    %v646 = vperm.slane %v20, 0
    %v647 = vperm.slane %v585, 0
    %v648 = vperm.slane %v586, 0
    %v649 = vperm.slane %v587, 0
    %v650 = vperm.slane %v588, 0
    %v651 = vperm.slane %v589, 0
    %v652 = vperm.slane %v590, 0
    %v653 = vperm.slane %v591, 0
    %v654 = vperm.slane %v21, 0
    %v655 = vperm.slane %v592, 0
    %v656 = vperm.slane %v593, 0
    %v657 = vperm.slane %v594, 0
    %v658 = vperm.slane %v595, 0
    %v659 = vperm.slane %v596, 0
    %v660 = vperm.slane %v597, 0
    %v661 = vperm.slane %v598, 0
    %v662 = vperm.slane %v22, 0
    %v663 = vperm.slane %v599, 0
    %v664 = vperm.slane %v600, 0
    %v665 = vperm.slane %v601, 0
    %v666 = vperm.slane %v602, 0
    %v667 = vperm.slane %v603, 0
    %v668 = vperm.slane %v604, 0
    %v669 = vperm.slane %v605, 0
    %v734 = vmul.f32 %v108, %v606
    %v735 = vmul.f32 %v115, %v607
    %v736 = vmul.f32 %v122, %v608
    %v737 = vmul.f32 %v129, %v609
    %v738 = vmul.f32 %v136, %v610
    %v739 = vmul.f32 %v143, %v611
    %v740 = vmul.f32 %v150, %v612
    %v741 = vmul.f32 %v157, %v613
    %v742 = vmul.f32 %v164, %v614
    %v743 = vmul.f32 %v171, %v615
    %v744 = vmul.f32 %v178, %v616
    %v745 = vmul.f32 %v185, %v617
    %v746 = vmul.f32 %v192, %v618
    %v747 = vmul.f32 %v199, %v619
    %v748 = vmul.f32 %v206, %v620
    %v749 = vmul.f32 %v213, %v621
    %v750 = vmul.f32 %v220, %v622
    %v751 = vmul.f32 %v227, %v623
    %v752 = vmul.f32 %v234, %v624
    %v753 = vmul.f32 %v241, %v625
    %v754 = vmul.f32 %v248, %v626
    %v755 = vmul.f32 %v255, %v627
    %v756 = vmul.f32 %v262, %v628
    %v757 = vmul.f32 %v269, %v629
    %v758 = vmul.f32 %v276, %v630
    %v759 = vmul.f32 %v283, %v631
    %v760 = vmul.f32 %v290, %v632
    %v761 = vmul.f32 %v297, %v633
    %v762 = vmul.f32 %v304, %v634
    %v763 = vmul.f32 %v311, %v635
    %v764 = vmul.f32 %v318, %v636
    %v765 = vmul.f32 %v325, %v637
    %v766 = vmul.f32 %v332, %v638
    %v767 = vmul.f32 %v339, %v639
    %v768 = vmul.f32 %v346, %v640
    %v769 = vmul.f32 %v353, %v641
    %v770 = vmul.f32 %v360, %v642
    %v771 = vmul.f32 %v367, %v643
    %v772 = vmul.f32 %v374, %v644
    %v773 = vmul.f32 %v381, %v645
    %v774 = vmul.f32 %v388, %v646
    %v775 = vmul.f32 %v395, %v647
    %v776 = vmul.f32 %v402, %v648
    %v777 = vmul.f32 %v409, %v649
    %v778 = vmul.f32 %v416, %v650
    %v779 = vmul.f32 %v423, %v651
    %v780 = vmul.f32 %v430, %v652
    %v781 = vmul.f32 %v437, %v653
    %v782 = vmul.f32 %v444, %v654
    %v783 = vmul.f32 %v451, %v655
    %v784 = vmul.f32 %v458, %v656
    %v785 = vmul.f32 %v465, %v657
    %v786 = vmul.f32 %v472, %v658
    %v787 = vmul.f32 %v479, %v659
    %v788 = vmul.f32 %v486, %v660
    %v789 = vmul.f32 %v493, %v661
    %v790 = vmul.f32 %v500, %v662
    %v791 = vmul.f32 %v507, %v663
    %v792 = vmul.f32 %v514, %v664
    %v793 = vmul.f32 %v521, %v665
    %v794 = vmul.f32 %v528, %v666
    %v795 = vmul.f32 %v535, %v667
    %v796 = vmul.f32 %v542, %v668
    %v797 = vmul.f32 %v549, %v669
    %v798 = vsel %vm28, %v734, 0.0
    %v799 = vsel %vm28, %v735, 0.0
    %v800 = vadd.f32 %v798, %v799
    %v801 = vsel %vm28, %v736, 0.0
    %v802 = vadd.f32 %v800, %v801
    %v803 = vsel %vm28, %v737, 0.0
    %v804 = vadd.f32 %v802, %v803
    %v805 = vsel %vm28, %v738, 0.0
    %v806 = vadd.f32 %v804, %v805
    %v807 = vsel %vm28, %v739, 0.0
    %v808 = vadd.f32 %v806, %v807
    %v809 = vsel %vm28, %v740, 0.0
    %v810 = vadd.f32 %v808, %v809
    %v811 = vsel %vm28, %v741, 0.0
    %v812 = vadd.f32 %v810, %v811
    %v813 = vsel %vm28, %v742, 0.0
    %v814 = vsel %vm28, %v743, 0.0
    %v815 = vadd.f32 %v813, %v814
    %v816 = vsel %vm28, %v744, 0.0
    %v817 = vadd.f32 %v815, %v816
    %v818 = vsel %vm28, %v745, 0.0
    %v819 = vadd.f32 %v817, %v818
    %v820 = vsel %vm28, %v746, 0.0
    %v821 = vadd.f32 %v819, %v820
    %v822 = vsel %vm28, %v747, 0.0
    %v823 = vadd.f32 %v821, %v822
    %v824 = vsel %vm28, %v748, 0.0
    %v825 = vadd.f32 %v823, %v824
    %v826 = vsel %vm28, %v749, 0.0
    %v827 = vadd.f32 %v825, %v826
    %v828 = vsel %vm28, %v750, 0.0
    %v829 = vsel %vm28, %v751, 0.0
    %v830 = vadd.f32 %v828, %v829
    %v831 = vsel %vm28, %v752, 0.0
    %v832 = vadd.f32 %v830, %v831
    %v833 = vsel %vm28, %v753, 0.0
    %v834 = vadd.f32 %v832, %v833
    %v835 = vsel %vm28, %v754, 0.0
    %v836 = vadd.f32 %v834, %v835
    %v837 = vsel %vm28, %v755, 0.0
    %v838 = vadd.f32 %v836, %v837
    %v839 = vsel %vm28, %v756, 0.0
    %v840 = vadd.f32 %v838, %v839
    %v841 = vsel %vm28, %v757, 0.0
    %v842 = vadd.f32 %v840, %v841
    %v843 = vsel %vm28, %v758, 0.0
    %v844 = vsel %vm28, %v759, 0.0
    %v845 = vadd.f32 %v843, %v844
    %v846 = vsel %vm28, %v760, 0.0
    %v847 = vadd.f32 %v845, %v846
    %v848 = vsel %vm28, %v761, 0.0
    %v849 = vadd.f32 %v847, %v848
    %v850 = vsel %vm28, %v762, 0.0
    %v851 = vadd.f32 %v849, %v850
    %v852 = vsel %vm28, %v763, 0.0
    %v853 = vadd.f32 %v851, %v852
    %v854 = vsel %vm28, %v764, 0.0
    %v855 = vadd.f32 %v853, %v854
    %v856 = vsel %vm28, %v765, 0.0
    %v857 = vadd.f32 %v855, %v856
    %v858 = vsel %vm28, %v766, 0.0
    %v859 = vsel %vm28, %v767, 0.0
    %v860 = vadd.f32 %v858, %v859
    %v861 = vsel %vm28, %v768, 0.0
    %v862 = vadd.f32 %v860, %v861
    %v863 = vsel %vm28, %v769, 0.0
    %v864 = vadd.f32 %v862, %v863
    %v865 = vsel %vm28, %v770, 0.0
    %v866 = vadd.f32 %v864, %v865
    %v867 = vsel %vm28, %v771, 0.0
    %v868 = vadd.f32 %v866, %v867
    %v869 = vsel %vm28, %v772, 0.0
    %v870 = vadd.f32 %v868, %v869
    %v871 = vsel %vm28, %v773, 0.0
    %v872 = vadd.f32 %v870, %v871
    %v873 = vsel %vm28, %v774, 0.0
    %v874 = vsel %vm28, %v775, 0.0
    %v875 = vadd.f32 %v873, %v874
    %v876 = vsel %vm28, %v776, 0.0
    %v877 = vadd.f32 %v875, %v876
    %v878 = vsel %vm28, %v777, 0.0
    %v879 = vadd.f32 %v877, %v878
    %v880 = vsel %vm28, %v778, 0.0
    %v881 = vadd.f32 %v879, %v880
    %v882 = vsel %vm28, %v779, 0.0
    %v883 = vadd.f32 %v881, %v882
    %v884 = vsel %vm28, %v780, 0.0
    %v885 = vadd.f32 %v883, %v884
    %v886 = vsel %vm28, %v781, 0.0
    %v887 = vadd.f32 %v885, %v886
    %v888 = vsel %vm28, %v782, 0.0
    %v889 = vsel %vm28, %v783, 0.0
    %v890 = vadd.f32 %v888, %v889
    %v891 = vsel %vm28, %v784, 0.0
    %v892 = vadd.f32 %v890, %v891
    %v893 = vsel %vm28, %v785, 0.0
    %v894 = vadd.f32 %v892, %v893
    %v895 = vsel %vm28, %v786, 0.0
    %v896 = vadd.f32 %v894, %v895
    %v897 = vsel %vm28, %v787, 0.0
    %v898 = vadd.f32 %v896, %v897
    %v899 = vsel %vm28, %v788, 0.0
    %v900 = vadd.f32 %v898, %v899
    %v901 = vsel %vm28, %v789, 0.0
    %v902 = vadd.f32 %v900, %v901
    %v903 = vsel %vm28, %v790, 0.0
    %v904 = vsel %vm28, %v791, 0.0
    %v905 = vadd.f32 %v903, %v904
    %v906 = vsel %vm28, %v792, 0.0
    %v907 = vadd.f32 %v905, %v906
    %v908 = vsel %vm28, %v793, 0.0
    %v909 = vadd.f32 %v907, %v908
    %v910 = vsel %vm28, %v794, 0.0
    %v911 = vadd.f32 %v909, %v910
    %v912 = vsel %vm28, %v795, 0.0
    %v913 = vadd.f32 %v911, %v912
    %v914 = vsel %vm28, %v796, 0.0
    %v915 = vadd.f32 %v913, %v914
    %v916 = vsel %vm28, %v797, 0.0
    %v917 = vadd.f32 %v915, %v916
    %v918 = vld [vmem:[%s2 + $0x2] ss:$0 sm:$0xff]
    %v919 = vmul.f32 %v812, %v918
    %v920 = vmul.f32 %v827, %v918
    %v921 = vmul.f32 %v842, %v918
    %v922 = vmul.f32 %v857, %v918
    %v923 = vmul.f32 %v872, %v918
    %v924 = vmul.f32 %v887, %v918
    %v925 = vmul.f32 %v902, %v918
    %v926 = vmul.f32 %v917, %v918
    %v927 = vld [vmem:[%s2 + $0x3] ss:$0 sm:$0xff]
    %v928 = vmul.f32 %v812, %v927
    %v929 = vmul.f32 %v827, %v927
    %v930 = vmul.f32 %v842, %v927
    %v931 = vmul.f32 %v857, %v927
    %v932 = vmul.f32 %v872, %v927
    %v933 = vmul.f32 %v887, %v927
    %v934 = vmul.f32 %v902, %v927
    %v935 = vmul.f32 %v917, %v927
    %937 = vset.pattern.permute.xlu0 0
    %938 = vperm.xlu0 %937, %v94
    %v939 = vpop.permute.xlu0 %938
    %942 = vset.pattern.permute.xlu0 0
    %943 = vperm.xlu0 %942, %v95
    %v944 = vpop.permute.xlu0 %943
    %947 = vset.pattern.permute.xlu0 0
    %948 = vperm.xlu0 %947, %v96
    %v949 = vpop.permute.xlu0 %948
    %952 = vset.pattern.permute.xlu0 0
    %953 = vperm.xlu0 %952, %v97
    %v954 = vpop.permute.xlu0 %953
    %957 = vset.pattern.permute.xlu0 0
    %958 = vperm.xlu0 %957, %v98
    %v959 = vpop.permute.xlu0 %958
    %962 = vset.pattern.permute.xlu0 0
    %963 = vperm.xlu0 %962, %v99
    %v964 = vpop.permute.xlu0 %963
    %967 = vset.pattern.permute.xlu0 0
    %968 = vperm.xlu0 %967, %v100
    %v969 = vpop.permute.xlu0 %968
    %972 = vset.pattern.permute.xlu0 0
    %973 = vperm.xlu0 %972, %v101
    %v974 = vpop.permute.xlu0 %973
    %v976 = vmul.f32 %v939, %v15
    %v977 = vmul.f32 %v944, %v16
    %v978 = vmul.f32 %v949, %v17
    %v979 = vmul.f32 %v954, %v18
    %v980 = vmul.f32 %v959, %v19
    %v981 = vmul.f32 %v964, %v20
    %v982 = vmul.f32 %v969, %v21
    %v983 = vmul.f32 %v974, %v22
    %v984 = vsel %vm28, %v976, 0.0
    %v985 = vrot.slane %v984, 4
    %v986 = vadd.f32 %v984, %v985
    %v987 = vrot.slane %v986, 2
    %v988 = vadd.f32 %v986, %v987
    %v989 = vrot.slane %v988, 1
    %v990 = vadd.f32 %v988, %v989
    %v991 = vsel %vm28, %v977, 0.0
    %v992 = vrot.slane %v991, 4
    %v993 = vadd.f32 %v991, %v992
    %v994 = vrot.slane %v993, 2
    %v995 = vadd.f32 %v993, %v994
    %v996 = vrot.slane %v995, 1
    %v997 = vadd.f32 %v995, %v996
    %v998 = vsel %vm28, %v978, 0.0
    %v999 = vrot.slane %v998, 4
    %v1000 = vadd.f32 %v998, %v999
    %v1001 = vrot.slane %v1000, 2
    %v1002 = vadd.f32 %v1000, %v1001
    %v1003 = vrot.slane %v1002, 1
    %v1004 = vadd.f32 %v1002, %v1003
    %v1005 = vsel %vm28, %v979, 0.0
    %v1006 = vrot.slane %v1005, 4
    %v1007 = vadd.f32 %v1005, %v1006
    %v1008 = vrot.slane %v1007, 2
    %v1009 = vadd.f32 %v1007, %v1008
    %v1010 = vrot.slane %v1009, 1
    %v1011 = vadd.f32 %v1009, %v1010
    %v1012 = vsel %vm28, %v980, 0.0
    %v1013 = vrot.slane %v1012, 4
    %v1014 = vadd.f32 %v1012, %v1013
    %v1015 = vrot.slane %v1014, 2
    %v1016 = vadd.f32 %v1014, %v1015
    %v1017 = vrot.slane %v1016, 1
    %v1018 = vadd.f32 %v1016, %v1017
    %v1019 = vsel %vm28, %v981, 0.0
    %v1020 = vrot.slane %v1019, 4
    %v1021 = vadd.f32 %v1019, %v1020
    %v1022 = vrot.slane %v1021, 2
    %v1023 = vadd.f32 %v1021, %v1022
    %v1024 = vrot.slane %v1023, 1
    %v1025 = vadd.f32 %v1023, %v1024
    %v1026 = vsel %vm28, %v982, 0.0
    %v1027 = vrot.slane %v1026, 4
    %v1028 = vadd.f32 %v1026, %v1027
    %v1029 = vrot.slane %v1028, 2
    %v1030 = vadd.f32 %v1028, %v1029
    %v1031 = vrot.slane %v1030, 1
    %v1032 = vadd.f32 %v1030, %v1031
    %v1033 = vsel %vm28, %v983, 0.0
    %v1034 = vrot.slane %v1033, 4
    %v1035 = vadd.f32 %v1033, %v1034
    %v1036 = vrot.slane %v1035, 2
    %v1037 = vadd.f32 %v1035, %v1036
    %v1038 = vrot.slane %v1037, 1
    %v1039 = vadd.f32 %v1037, %v1038
    %v1040 = vmul.f32 %v990, %v919
    %v1041 = vmul.f32 %v997, %v920
    %v1042 = vmul.f32 %v1004, %v921
    %v1043 = vmul.f32 %v1011, %v922
    %v1044 = vmul.f32 %v1018, %v923
    %v1045 = vmul.f32 %v1025, %v924
    %v1046 = vmul.f32 %v1032, %v925
    %v1047 = vmul.f32 %v1039, %v926
    %v1048 = vsel %vm28, %v1040, 0.0
    %1049 = vadd.xlane.f32.xlu0 %v1048
    %v1050 = vpop.xlane.xlu0 %1049
    %v1051 = vsel %vm28, %v1041, 0.0
    %1052 = vadd.xlane.f32.xlu0 %v1051
    %v1053 = vpop.xlane.xlu0 %1052
    %v1054 = vsel %vm28, %v1042, 0.0
    %1055 = vadd.xlane.f32.xlu0 %v1054
    %v1056 = vpop.xlane.xlu0 %1055
    %v1057 = vsel %vm28, %v1043, 0.0
    %1058 = vadd.xlane.f32.xlu0 %v1057
    %v1059 = vpop.xlane.xlu0 %1058
    %v1060 = vsel %vm28, %v1044, 0.0
    %1061 = vadd.xlane.f32.xlu0 %v1060
    %v1062 = vpop.xlane.xlu0 %1061
    %v1063 = vsel %vm28, %v1045, 0.0
    %1064 = vadd.xlane.f32.xlu0 %v1063
    %v1065 = vpop.xlane.xlu0 %1064
    %v1066 = vsel %vm28, %v1046, 0.0
    %1067 = vadd.xlane.f32.xlu0 %v1066
    %v1068 = vpop.xlane.xlu0 %1067
    %v1069 = vsel %vm28, %v1047, 0.0
    %1070 = vadd.xlane.f32.xlu0 %v1069
    %v1071 = vpop.xlane.xlu0 %1070
    %v1072 = vld [vmem:[%s2 + $0x1] ss:$0 sm:$0xff]
    %1074 = vset.pattern.permute.xlu0 0
    %1075 = vperm.xlu0 %1074, %v1072
    %v1076 = vpop.permute.xlu0 %1075
    %v1078 = vadd.f32 %v1050, %v1076
    %v1079 = vadd.f32 %v1053, %v1076
    %v1080 = vadd.f32 %v1056, %v1076
    %v1081 = vadd.f32 %v1059, %v1076
    %v1082 = vadd.f32 %v1062, %v1076
    %v1083 = vadd.f32 %v1065, %v1076
    %v1084 = vadd.f32 %v1068, %v1076
    %v1085 = vadd.f32 %v1071, %v1076
    %v1094 = vlaneseq
    %v1095 = vand.u32 %v1094, 127
    %v1096 = vperm.slane %v1078, %v1095
    %v1097 = vperm.slane %v1079, %v1095
    %v1098 = vperm.slane %v1080, %v1095
    %v1099 = vperm.slane %v1081, %v1095
    %v1100 = vperm.slane %v1082, %v1095
    %v1101 = vperm.slane %v1083, %v1095
    %v1102 = vperm.slane %v1084, %v1095
    %v1103 = vperm.slane %v1085, %v1095
    %vm1104 = vcmask 1041409
    %v1105 = vsel %vm1104, %v1097, %v1096
    %vm1106 = vcmask 1042434
    %v1107 = vsel %vm1106, %v1098, %v1105
    %vm1108 = vcmask 1043459
    %v1109 = vsel %vm1108, %v1099, %v1107
    %vm1110 = vcmask 1044484
    %v1111 = vsel %vm1110, %v1100, %v1109
    %vm1112 = vcmask 1045509
    %v1113 = vsel %vm1112, %v1101, %v1111
    %vm1114 = vcmask 1046534
    %v1115 = vsel %vm1114, %v1102, %v1113
    %vm1116 = vcmask 1047559
    %v1117 = vsel %vm1116, %v1103, %v1115
    %vm1119 = vcmask 64512
    %1120 = vst.msk [vmem:[#allocation2] sm:$0xff] %vm1119, %v1117
    %v1121 = vmul.f32 %v990, %v928
    %v1122 = vmul.f32 %v997, %v929
    %v1123 = vmul.f32 %v1004, %v930
    %v1124 = vmul.f32 %v1011, %v931
    %v1125 = vmul.f32 %v1018, %v932
    %v1126 = vmul.f32 %v1025, %v933
    %v1127 = vmul.f32 %v1032, %v934
    %v1128 = vmul.f32 %v1039, %v935
    %v1129 = vsel %vm28, %v1121, 0.0
    %1130 = vadd.xlane.f32.xlu0 %v1129
    %v1131 = vpop.xlane.xlu0 %1130
    %v1132 = vsel %vm28, %v1122, 0.0
    %1133 = vadd.xlane.f32.xlu0 %v1132
    %v1134 = vpop.xlane.xlu0 %1133
    %v1135 = vsel %vm28, %v1123, 0.0
    %1136 = vadd.xlane.f32.xlu0 %v1135
    %v1137 = vpop.xlane.xlu0 %1136
    %v1138 = vsel %vm28, %v1124, 0.0
    %1139 = vadd.xlane.f32.xlu0 %v1138
    %v1140 = vpop.xlane.xlu0 %1139
    %v1141 = vsel %vm28, %v1125, 0.0
    %1142 = vadd.xlane.f32.xlu0 %v1141
    %v1143 = vpop.xlane.xlu0 %1142
    %v1144 = vsel %vm28, %v1126, 0.0
    %1145 = vadd.xlane.f32.xlu0 %v1144
    %v1146 = vpop.xlane.xlu0 %1145
    %v1147 = vsel %vm28, %v1127, 0.0
    %1148 = vadd.xlane.f32.xlu0 %v1147
    %v1149 = vpop.xlane.xlu0 %1148
    %v1150 = vsel %vm28, %v1128, 0.0
    %1151 = vadd.xlane.f32.xlu0 %v1150
    %v1152 = vpop.xlane.xlu0 %1151
    %v1153 = vld [vmem:[%s2 + $0x1] ss:$0 sm:$0xff]
    %1155 = vset.pattern.permute.xlu0 1
    %1156 = vperm.xlu0 %1155, %v1153
    %v1157 = vpop.permute.xlu0 %1156
    %v1159 = vadd.f32 %v1131, %v1157
    %v1160 = vadd.f32 %v1134, %v1157
    %v1161 = vadd.f32 %v1137, %v1157
    %v1162 = vadd.f32 %v1140, %v1157
    %v1163 = vadd.f32 %v1143, %v1157
    %v1164 = vadd.f32 %v1146, %v1157
    %v1165 = vadd.f32 %v1149, %v1157
    %v1166 = vadd.f32 %v1152, %v1157
    %v1175 = vadd.s32 %v1095, 4294967288
    %v1176 = vperm.slane %v1159, %v1175
    %v1177 = vperm.slane %v1160, %v1175
    %v1178 = vperm.slane %v1161, %v1175
    %v1179 = vperm.slane %v1162, %v1175
    %v1180 = vperm.slane %v1163, %v1175
    %v1181 = vperm.slane %v1164, %v1175
    %v1182 = vperm.slane %v1165, %v1175
    %v1183 = vperm.slane %v1166, %v1175
    %v1184 = vsel %vm1104, %v1177, %v1176
    %v1185 = vsel %vm1106, %v1178, %v1184
    %v1186 = vsel %vm1108, %v1179, %v1185
    %v1187 = vsel %vm1110, %v1180, %v1186
    %v1188 = vsel %vm1112, %v1181, %v1187
    %v1189 = vsel %vm1114, %v1182, %v1188
    %v1190 = vsel %vm1116, %v1183, %v1189
    %vm1192 = vcmask 130112
    %1193 = vst.msk [vmem:[#allocation2] sm:$0xff] %vm1192, %v1190
    %1194 = vset.pattern.permute.xlu0 1
    %1195 = vperm.xlu0 %1194, %v94
    %v1196 = vpop.permute.xlu0 %1195
    %1198 = vset.pattern.permute.xlu0 1
    %1199 = vperm.xlu0 %1198, %v95
    %v1200 = vpop.permute.xlu0 %1199
    %1202 = vset.pattern.permute.xlu0 1
    %1203 = vperm.xlu0 %1202, %v96
    %v1204 = vpop.permute.xlu0 %1203
    %1206 = vset.pattern.permute.xlu0 1
    %1207 = vperm.xlu0 %1206, %v97
    %v1208 = vpop.permute.xlu0 %1207
    %1210 = vset.pattern.permute.xlu0 1
    %1211 = vperm.xlu0 %1210, %v98
    %v1212 = vpop.permute.xlu0 %1211
    %1214 = vset.pattern.permute.xlu0 1
    %1215 = vperm.xlu0 %1214, %v99
    %v1216 = vpop.permute.xlu0 %1215
    %1218 = vset.pattern.permute.xlu0 1
    %1219 = vperm.xlu0 %1218, %v100
    %v1220 = vpop.permute.xlu0 %1219
    %1222 = vset.pattern.permute.xlu0 1
    %1223 = vperm.xlu0 %1222, %v101
    %v1224 = vpop.permute.xlu0 %1223
    %v1226 = vmul.f32 %v1196, %v15
    %v1227 = vmul.f32 %v1200, %v16
    %v1228 = vmul.f32 %v1204, %v17
    %v1229 = vmul.f32 %v1208, %v18
    %v1230 = vmul.f32 %v1212, %v19
    %v1231 = vmul.f32 %v1216, %v20
    %v1232 = vmul.f32 %v1220, %v21
    %v1233 = vmul.f32 %v1224, %v22
    %v1234 = vsel %vm28, %v1226, 0.0
    %v1235 = vrot.slane %v1234, 4
    %v1236 = vadd.f32 %v1234, %v1235
    %v1237 = vrot.slane %v1236, 2
    %v1238 = vadd.f32 %v1236, %v1237
    %v1239 = vrot.slane %v1238, 1
    %v1240 = vadd.f32 %v1238, %v1239
    %v1241 = vsel %vm28, %v1227, 0.0
    %v1242 = vrot.slane %v1241, 4
    %v1243 = vadd.f32 %v1241, %v1242
    %v1244 = vrot.slane %v1243, 2
    %v1245 = vadd.f32 %v1243, %v1244
    %v1246 = vrot.slane %v1245, 1
    %v1247 = vadd.f32 %v1245, %v1246
    %v1248 = vsel %vm28, %v1228, 0.0
    %v1249 = vrot.slane %v1248, 4
    %v1250 = vadd.f32 %v1248, %v1249
    %v1251 = vrot.slane %v1250, 2
    %v1252 = vadd.f32 %v1250, %v1251
    %v1253 = vrot.slane %v1252, 1
    %v1254 = vadd.f32 %v1252, %v1253
    %v1255 = vsel %vm28, %v1229, 0.0
    %v1256 = vrot.slane %v1255, 4
    %v1257 = vadd.f32 %v1255, %v1256
    %v1258 = vrot.slane %v1257, 2
    %v1259 = vadd.f32 %v1257, %v1258
    %v1260 = vrot.slane %v1259, 1
    %v1261 = vadd.f32 %v1259, %v1260
    %v1262 = vsel %vm28, %v1230, 0.0
    %v1263 = vrot.slane %v1262, 4
    %v1264 = vadd.f32 %v1262, %v1263
    %v1265 = vrot.slane %v1264, 2
    %v1266 = vadd.f32 %v1264, %v1265
    %v1267 = vrot.slane %v1266, 1
    %v1268 = vadd.f32 %v1266, %v1267
    %v1269 = vsel %vm28, %v1231, 0.0
    %v1270 = vrot.slane %v1269, 4
    %v1271 = vadd.f32 %v1269, %v1270
    %v1272 = vrot.slane %v1271, 2
    %v1273 = vadd.f32 %v1271, %v1272
    %v1274 = vrot.slane %v1273, 1
    %v1275 = vadd.f32 %v1273, %v1274
    %v1276 = vsel %vm28, %v1232, 0.0
    %v1277 = vrot.slane %v1276, 4
    %v1278 = vadd.f32 %v1276, %v1277
    %v1279 = vrot.slane %v1278, 2
    %v1280 = vadd.f32 %v1278, %v1279
    %v1281 = vrot.slane %v1280, 1
    %v1282 = vadd.f32 %v1280, %v1281
    %v1283 = vsel %vm28, %v1233, 0.0
    %v1284 = vrot.slane %v1283, 4
    %v1285 = vadd.f32 %v1283, %v1284
    %v1286 = vrot.slane %v1285, 2
    %v1287 = vadd.f32 %v1285, %v1286
    %v1288 = vrot.slane %v1287, 1
    %v1289 = vadd.f32 %v1287, %v1288
    %v1290 = vmul.f32 %v1240, %v919
    %v1291 = vmul.f32 %v1247, %v920
    %v1292 = vmul.f32 %v1254, %v921
    %v1293 = vmul.f32 %v1261, %v922
    %v1294 = vmul.f32 %v1268, %v923
    %v1295 = vmul.f32 %v1275, %v924
    %v1296 = vmul.f32 %v1282, %v925
    %v1297 = vmul.f32 %v1289, %v926
    %v1298 = vsel %vm28, %v1290, 0.0
    %1299 = vadd.xlane.f32.xlu0 %v1298
    %v1300 = vpop.xlane.xlu0 %1299
    %v1301 = vsel %vm28, %v1291, 0.0
    %1302 = vadd.xlane.f32.xlu0 %v1301
    %v1303 = vpop.xlane.xlu0 %1302
    %v1304 = vsel %vm28, %v1292, 0.0
    %1305 = vadd.xlane.f32.xlu0 %v1304
    %v1306 = vpop.xlane.xlu0 %1305
    %v1307 = vsel %vm28, %v1293, 0.0
    %1308 = vadd.xlane.f32.xlu0 %v1307
    %v1309 = vpop.xlane.xlu0 %1308
    %v1310 = vsel %vm28, %v1294, 0.0
    %1311 = vadd.xlane.f32.xlu0 %v1310
    %v1312 = vpop.xlane.xlu0 %1311
    %v1313 = vsel %vm28, %v1295, 0.0
    %1314 = vadd.xlane.f32.xlu0 %v1313
    %v1315 = vpop.xlane.xlu0 %1314
    %v1316 = vsel %vm28, %v1296, 0.0
    %1317 = vadd.xlane.f32.xlu0 %v1316
    %v1318 = vpop.xlane.xlu0 %1317
    %v1319 = vsel %vm28, %v1297, 0.0
    %1320 = vadd.xlane.f32.xlu0 %v1319
    %v1321 = vpop.xlane.xlu0 %1320
    %v1322 = vld [vmem:[%s2 + $0x1] ss:$0 sm:$0xff]
    %1324 = vset.pattern.permute.xlu0 0
    %1325 = vperm.xlu0 %1324, %v1322
    %v1326 = vpop.permute.xlu0 %1325
    %v1328 = vadd.f32 %v1300, %v1326
    %v1329 = vadd.f32 %v1303, %v1326
    %v1330 = vadd.f32 %v1306, %v1326
    %v1331 = vadd.f32 %v1309, %v1326
    %v1332 = vadd.f32 %v1312, %v1326
    %v1333 = vadd.f32 %v1315, %v1326
    %v1334 = vadd.f32 %v1318, %v1326
    %v1335 = vadd.f32 %v1321, %v1326
    %v1344 = vadd.s32 %v1095, 4294967280
    %v1345 = vperm.slane %v1328, %v1344
    %v1346 = vperm.slane %v1329, %v1344
    %v1347 = vperm.slane %v1330, %v1344
    %v1348 = vperm.slane %v1331, %v1344
    %v1349 = vperm.slane %v1332, %v1344
    %v1350 = vperm.slane %v1333, %v1344
    %v1351 = vperm.slane %v1334, %v1344
    %v1352 = vperm.slane %v1335, %v1344
    %v1353 = vsel %vm1104, %v1346, %v1345
    %v1354 = vsel %vm1106, %v1347, %v1353
    %v1355 = vsel %vm1108, %v1348, %v1354
    %v1356 = vsel %vm1110, %v1349, %v1355
    %v1357 = vsel %vm1112, %v1350, %v1356
    %v1358 = vsel %vm1114, %v1351, %v1357
    %v1359 = vsel %vm1116, %v1352, %v1358
    %vm1361 = vcmask 195712
    %1362 = vst.msk [vmem:[#allocation2] sm:$0xff] %vm1361, %v1359
    %v1363 = vmul.f32 %v1240, %v928
    %v1364 = vmul.f32 %v1247, %v929
    %v1365 = vmul.f32 %v1254, %v930
    %v1366 = vmul.f32 %v1261, %v931
    %v1367 = vmul.f32 %v1268, %v932
    %v1368 = vmul.f32 %v1275, %v933
    %v1369 = vmul.f32 %v1282, %v934
    %v1370 = vmul.f32 %v1289, %v935
    %v1371 = vsel %vm28, %v1363, 0.0
    %1372 = vadd.xlane.f32.xlu0 %v1371
    %v1373 = vpop.xlane.xlu0 %1372
    %v1374 = vsel %vm28, %v1364, 0.0
    %1375 = vadd.xlane.f32.xlu0 %v1374
    %v1376 = vpop.xlane.xlu0 %1375
    %v1377 = vsel %vm28, %v1365, 0.0
    %1378 = vadd.xlane.f32.xlu0 %v1377
    %v1379 = vpop.xlane.xlu0 %1378
    %v1380 = vsel %vm28, %v1366, 0.0
    %1381 = vadd.xlane.f32.xlu0 %v1380
    %v1382 = vpop.xlane.xlu0 %1381
    %v1383 = vsel %vm28, %v1367, 0.0
    %1384 = vadd.xlane.f32.xlu0 %v1383
    %v1385 = vpop.xlane.xlu0 %1384
    %v1386 = vsel %vm28, %v1368, 0.0
    %1387 = vadd.xlane.f32.xlu0 %v1386
    %v1388 = vpop.xlane.xlu0 %1387
    %v1389 = vsel %vm28, %v1369, 0.0
    %1390 = vadd.xlane.f32.xlu0 %v1389
    %v1391 = vpop.xlane.xlu0 %1390
    %v1392 = vsel %vm28, %v1370, 0.0
    %1393 = vadd.xlane.f32.xlu0 %v1392
    %v1394 = vpop.xlane.xlu0 %1393
    %v1395 = vld [vmem:[%s2 + $0x1] ss:$0 sm:$0xff]
    %1397 = vset.pattern.permute.xlu0 1
    %1398 = vperm.xlu0 %1397, %v1395
    %v1399 = vpop.permute.xlu0 %1398
    %v1401 = vadd.f32 %v1373, %v1399
    %v1402 = vadd.f32 %v1376, %v1399
    %v1403 = vadd.f32 %v1379, %v1399
    %v1404 = vadd.f32 %v1382, %v1399
    %v1405 = vadd.f32 %v1385, %v1399
    %v1406 = vadd.f32 %v1388, %v1399
    %v1407 = vadd.f32 %v1391, %v1399
    %v1408 = vadd.f32 %v1394, %v1399
    %v1417 = vadd.s32 %v1095, 4294967272
    %v1418 = vperm.slane %v1401, %v1417
    %v1419 = vperm.slane %v1402, %v1417
    %v1420 = vperm.slane %v1403, %v1417
    %v1421 = vperm.slane %v1404, %v1417
    %v1422 = vperm.slane %v1405, %v1417
    %v1423 = vperm.slane %v1406, %v1417
    %v1424 = vperm.slane %v1407, %v1417
    %v1425 = vperm.slane %v1408, %v1417
    %v1426 = vsel %vm1104, %v1419, %v1418
    %v1427 = vsel %vm1106, %v1420, %v1426
    %v1428 = vsel %vm1108, %v1421, %v1427
    %v1429 = vsel %vm1110, %v1422, %v1428
    %v1430 = vsel %vm1112, %v1423, %v1429
    %v1431 = vsel %vm1114, %v1424, %v1430
    %v1432 = vsel %vm1116, %v1425, %v1431
    %vm1434 = vcmask 261312
    %1435 = vst.msk [vmem:[#allocation2] sm:$0xff] %vm1434, %v1432
    %1436 = vset.pattern.permute.xlu0 2
    %1437 = vperm.xlu0 %1436, %v94
    %v1438 = vpop.permute.xlu0 %1437
    %1440 = vset.pattern.permute.xlu0 2
    %1441 = vperm.xlu0 %1440, %v95
    %v1442 = vpop.permute.xlu0 %1441
    %1444 = vset.pattern.permute.xlu0 2
    %1445 = vperm.xlu0 %1444, %v96
    %v1446 = vpop.permute.xlu0 %1445
    %1448 = vset.pattern.permute.xlu0 2
    %1449 = vperm.xlu0 %1448, %v97
    %v1450 = vpop.permute.xlu0 %1449
    %1452 = vset.pattern.permute.xlu0 2
    %1453 = vperm.xlu0 %1452, %v98
    %v1454 = vpop.permute.xlu0 %1453
    %1456 = vset.pattern.permute.xlu0 2
    %1457 = vperm.xlu0 %1456, %v99
    %v1458 = vpop.permute.xlu0 %1457
    %1460 = vset.pattern.permute.xlu0 2
    %1461 = vperm.xlu0 %1460, %v100
    %v1462 = vpop.permute.xlu0 %1461
    %1464 = vset.pattern.permute.xlu0 2
    %1465 = vperm.xlu0 %1464, %v101
    %v1466 = vpop.permute.xlu0 %1465
    %v1468 = vmul.f32 %v1438, %v15
    %v1469 = vmul.f32 %v1442, %v16
    %v1470 = vmul.f32 %v1446, %v17
    %v1471 = vmul.f32 %v1450, %v18
    %v1472 = vmul.f32 %v1454, %v19
    %v1473 = vmul.f32 %v1458, %v20
    %v1474 = vmul.f32 %v1462, %v21
    %v1475 = vmul.f32 %v1466, %v22
    %v1476 = vsel %vm28, %v1468, 0.0
    %v1477 = vrot.slane %v1476, 4
    %v1478 = vadd.f32 %v1476, %v1477
    %v1479 = vrot.slane %v1478, 2
    %v1480 = vadd.f32 %v1478, %v1479
    %v1481 = vrot.slane %v1480, 1
    %v1482 = vadd.f32 %v1480, %v1481
    %v1483 = vsel %vm28, %v1469, 0.0
    %v1484 = vrot.slane %v1483, 4
    %v1485 = vadd.f32 %v1483, %v1484
    %v1486 = vrot.slane %v1485, 2
    %v1487 = vadd.f32 %v1485, %v1486
    %v1488 = vrot.slane %v1487, 1
    %v1489 = vadd.f32 %v1487, %v1488
    %v1490 = vsel %vm28, %v1470, 0.0
    %v1491 = vrot.slane %v1490, 4
    %v1492 = vadd.f32 %v1490, %v1491
    %v1493 = vrot.slane %v1492, 2
    %v1494 = vadd.f32 %v1492, %v1493
    %v1495 = vrot.slane %v1494, 1
    %v1496 = vadd.f32 %v1494, %v1495
    %v1497 = vsel %vm28, %v1471, 0.0
    %v1498 = vrot.slane %v1497, 4
    %v1499 = vadd.f32 %v1497, %v1498
    %v1500 = vrot.slane %v1499, 2
    %v1501 = vadd.f32 %v1499, %v1500
    %v1502 = vrot.slane %v1501, 1
    %v1503 = vadd.f32 %v1501, %v1502
    %v1504 = vsel %vm28, %v1472, 0.0
    %v1505 = vrot.slane %v1504, 4
    %v1506 = vadd.f32 %v1504, %v1505
    %v1507 = vrot.slane %v1506, 2
    %v1508 = vadd.f32 %v1506, %v1507
    %v1509 = vrot.slane %v1508, 1
    %v1510 = vadd.f32 %v1508, %v1509
    %v1511 = vsel %vm28, %v1473, 0.0
    %v1512 = vrot.slane %v1511, 4
    %v1513 = vadd.f32 %v1511, %v1512
    %v1514 = vrot.slane %v1513, 2
    %v1515 = vadd.f32 %v1513, %v1514
    %v1516 = vrot.slane %v1515, 1
    %v1517 = vadd.f32 %v1515, %v1516
    %v1518 = vsel %vm28, %v1474, 0.0
    %v1519 = vrot.slane %v1518, 4
    %v1520 = vadd.f32 %v1518, %v1519
    %v1521 = vrot.slane %v1520, 2
    %v1522 = vadd.f32 %v1520, %v1521
    %v1523 = vrot.slane %v1522, 1
    %v1524 = vadd.f32 %v1522, %v1523
    %v1525 = vsel %vm28, %v1475, 0.0
    %v1526 = vrot.slane %v1525, 4
    %v1527 = vadd.f32 %v1525, %v1526
    %v1528 = vrot.slane %v1527, 2
    %v1529 = vadd.f32 %v1527, %v1528
    %v1530 = vrot.slane %v1529, 1
    %v1531 = vadd.f32 %v1529, %v1530
    %v1532 = vmul.f32 %v1482, %v919
    %v1533 = vmul.f32 %v1489, %v920
    %v1534 = vmul.f32 %v1496, %v921
    %v1535 = vmul.f32 %v1503, %v922
    %v1536 = vmul.f32 %v1510, %v923
    %v1537 = vmul.f32 %v1517, %v924
    %v1538 = vmul.f32 %v1524, %v925
    %v1539 = vmul.f32 %v1531, %v926
    %v1540 = vsel %vm28, %v1532, 0.0
    %1541 = vadd.xlane.f32.xlu0 %v1540
    %v1542 = vpop.xlane.xlu0 %1541
    %v1543 = vsel %vm28, %v1533, 0.0
    %1544 = vadd.xlane.f32.xlu0 %v1543
    %v1545 = vpop.xlane.xlu0 %1544
    %v1546 = vsel %vm28, %v1534, 0.0
    %1547 = vadd.xlane.f32.xlu0 %v1546
    %v1548 = vpop.xlane.xlu0 %1547
    %v1549 = vsel %vm28, %v1535, 0.0
    %1550 = vadd.xlane.f32.xlu0 %v1549
    %v1551 = vpop.xlane.xlu0 %1550
    %v1552 = vsel %vm28, %v1536, 0.0
    %1553 = vadd.xlane.f32.xlu0 %v1552
    %v1554 = vpop.xlane.xlu0 %1553
    %v1555 = vsel %vm28, %v1537, 0.0
    %1556 = vadd.xlane.f32.xlu0 %v1555
    %v1557 = vpop.xlane.xlu0 %1556
    %v1558 = vsel %vm28, %v1538, 0.0
    %1559 = vadd.xlane.f32.xlu0 %v1558
    %v1560 = vpop.xlane.xlu0 %1559
    %v1561 = vsel %vm28, %v1539, 0.0
    %1562 = vadd.xlane.f32.xlu0 %v1561
    %v1563 = vpop.xlane.xlu0 %1562
    %v1564 = vld [vmem:[%s2 + $0x1] ss:$0 sm:$0xff]
    %1566 = vset.pattern.permute.xlu0 0
    %1567 = vperm.xlu0 %1566, %v1564
    %v1568 = vpop.permute.xlu0 %1567
    %v1570 = vadd.f32 %v1542, %v1568
    %v1571 = vadd.f32 %v1545, %v1568
    %v1572 = vadd.f32 %v1548, %v1568
    %v1573 = vadd.f32 %v1551, %v1568
    %v1574 = vadd.f32 %v1554, %v1568
    %v1575 = vadd.f32 %v1557, %v1568
    %v1576 = vadd.f32 %v1560, %v1568
    %v1577 = vadd.f32 %v1563, %v1568
    %v1586 = vadd.s32 %v1095, 4294967264
    %v1587 = vperm.slane %v1570, %v1586
    %v1588 = vperm.slane %v1571, %v1586
    %v1589 = vperm.slane %v1572, %v1586
    %v1590 = vperm.slane %v1573, %v1586
    %v1591 = vperm.slane %v1574, %v1586
    %v1592 = vperm.slane %v1575, %v1586
    %v1593 = vperm.slane %v1576, %v1586
    %v1594 = vperm.slane %v1577, %v1586
    %v1595 = vsel %vm1104, %v1588, %v1587
    %v1596 = vsel %vm1106, %v1589, %v1595
    %v1597 = vsel %vm1108, %v1590, %v1596
    %v1598 = vsel %vm1110, %v1591, %v1597
    %v1599 = vsel %vm1112, %v1592, %v1598
    %v1600 = vsel %vm1114, %v1593, %v1599
    %v1601 = vsel %vm1116, %v1594, %v1600
    %vm1603 = vcmask 326912
    %1604 = vst.msk [vmem:[#allocation2] sm:$0xff] %vm1603, %v1601
    %v1605 = vmul.f32 %v1482, %v928
    %v1606 = vmul.f32 %v1489, %v929
    %v1607 = vmul.f32 %v1496, %v930
    %v1608 = vmul.f32 %v1503, %v931
    %v1609 = vmul.f32 %v1510, %v932
    %v1610 = vmul.f32 %v1517, %v933
    %v1611 = vmul.f32 %v1524, %v934
    %v1612 = vmul.f32 %v1531, %v935
    %v1613 = vsel %vm28, %v1605, 0.0
    %1614 = vadd.xlane.f32.xlu0 %v1613
    %v1615 = vpop.xlane.xlu0 %1614
    %v1616 = vsel %vm28, %v1606, 0.0
    %1617 = vadd.xlane.f32.xlu0 %v1616
    %v1618 = vpop.xlane.xlu0 %1617
    %v1619 = vsel %vm28, %v1607, 0.0
    %1620 = vadd.xlane.f32.xlu0 %v1619
    %v1621 = vpop.xlane.xlu0 %1620
    %v1622 = vsel %vm28, %v1608, 0.0
    %1623 = vadd.xlane.f32.xlu0 %v1622
    %v1624 = vpop.xlane.xlu0 %1623
    %v1625 = vsel %vm28, %v1609, 0.0
    %1626 = vadd.xlane.f32.xlu0 %v1625
    %v1627 = vpop.xlane.xlu0 %1626
    %v1628 = vsel %vm28, %v1610, 0.0
    %1629 = vadd.xlane.f32.xlu0 %v1628
    %v1630 = vpop.xlane.xlu0 %1629
    %v1631 = vsel %vm28, %v1611, 0.0
    %1632 = vadd.xlane.f32.xlu0 %v1631
    %v1633 = vpop.xlane.xlu0 %1632
    %v1634 = vsel %vm28, %v1612, 0.0
    %1635 = vadd.xlane.f32.xlu0 %v1634
    %v1636 = vpop.xlane.xlu0 %1635
    %v1637 = vld [vmem:[%s2 + $0x1] ss:$0 sm:$0xff]
    %1639 = vset.pattern.permute.xlu0 1
    %1640 = vperm.xlu0 %1639, %v1637
    %v1641 = vpop.permute.xlu0 %1640
    %v1643 = vadd.f32 %v1615, %v1641
    %v1644 = vadd.f32 %v1618, %v1641
    %v1645 = vadd.f32 %v1621, %v1641
    %v1646 = vadd.f32 %v1624, %v1641
    %v1647 = vadd.f32 %v1627, %v1641
    %v1648 = vadd.f32 %v1630, %v1641
    %v1649 = vadd.f32 %v1633, %v1641
    %v1650 = vadd.f32 %v1636, %v1641
    %v1659 = vadd.s32 %v1095, 4294967256
    %v1660 = vperm.slane %v1643, %v1659
    %v1661 = vperm.slane %v1644, %v1659
    %v1662 = vperm.slane %v1645, %v1659
    %v1663 = vperm.slane %v1646, %v1659
    %v1664 = vperm.slane %v1647, %v1659
    %v1665 = vperm.slane %v1648, %v1659
    %v1666 = vperm.slane %v1649, %v1659
    %v1667 = vperm.slane %v1650, %v1659
    %v1668 = vsel %vm1104, %v1661, %v1660
    %v1669 = vsel %vm1106, %v1662, %v1668
    %v1670 = vsel %vm1108, %v1663, %v1669
    %v1671 = vsel %vm1110, %v1664, %v1670
    %v1672 = vsel %vm1112, %v1665, %v1671
    %v1673 = vsel %vm1114, %v1666, %v1672
    %v1674 = vsel %vm1116, %v1667, %v1673
    %vm1676 = vcmask 392512
    %1677 = vst.msk [vmem:[#allocation2] sm:$0xff] %vm1676, %v1674
    %1678 = vset.pattern.permute.xlu0 3
    %1679 = vperm.xlu0 %1678, %v94
    %v1680 = vpop.permute.xlu0 %1679
    %1682 = vset.pattern.permute.xlu0 3
    %1683 = vperm.xlu0 %1682, %v95
    %v1684 = vpop.permute.xlu0 %1683
    %1686 = vset.pattern.permute.xlu0 3
    %1687 = vperm.xlu0 %1686, %v96
    %v1688 = vpop.permute.xlu0 %1687
    %1690 = vset.pattern.permute.xlu0 3
    %1691 = vperm.xlu0 %1690, %v97
    %v1692 = vpop.permute.xlu0 %1691
    %1694 = vset.pattern.permute.xlu0 3
    %1695 = vperm.xlu0 %1694, %v98
    %v1696 = vpop.permute.xlu0 %1695
    %1698 = vset.pattern.permute.xlu0 3
    %1699 = vperm.xlu0 %1698, %v99
    %v1700 = vpop.permute.xlu0 %1699
    %1702 = vset.pattern.permute.xlu0 3
    %1703 = vperm.xlu0 %1702, %v100
    %v1704 = vpop.permute.xlu0 %1703
    %1706 = vset.pattern.permute.xlu0 3
    %1707 = vperm.xlu0 %1706, %v101
    %v1708 = vpop.permute.xlu0 %1707
    %v1710 = vmul.f32 %v1680, %v15
    %v1711 = vmul.f32 %v1684, %v16
    %v1712 = vmul.f32 %v1688, %v17
    %v1713 = vmul.f32 %v1692, %v18
    %v1714 = vmul.f32 %v1696, %v19
    %v1715 = vmul.f32 %v1700, %v20
    %v1716 = vmul.f32 %v1704, %v21
    %v1717 = vmul.f32 %v1708, %v22
    %v1718 = vsel %vm28, %v1710, 0.0
    %v1719 = vrot.slane %v1718, 4
    %v1720 = vadd.f32 %v1718, %v1719
    %v1721 = vrot.slane %v1720, 2
    %v1722 = vadd.f32 %v1720, %v1721
    %v1723 = vrot.slane %v1722, 1
    %v1724 = vadd.f32 %v1722, %v1723
    %v1725 = vsel %vm28, %v1711, 0.0
    %v1726 = vrot.slane %v1725, 4
    %v1727 = vadd.f32 %v1725, %v1726
    %v1728 = vrot.slane %v1727, 2
    %v1729 = vadd.f32 %v1727, %v1728
    %v1730 = vrot.slane %v1729, 1
    %v1731 = vadd.f32 %v1729, %v1730
    %v1732 = vsel %vm28, %v1712, 0.0
    %v1733 = vrot.slane %v1732, 4
    %v1734 = vadd.f32 %v1732, %v1733
    %v1735 = vrot.slane %v1734, 2
    %v1736 = vadd.f32 %v1734, %v1735
    %v1737 = vrot.slane %v1736, 1
    %v1738 = vadd.f32 %v1736, %v1737
    %v1739 = vsel %vm28, %v1713, 0.0
    %v1740 = vrot.slane %v1739, 4
    %v1741 = vadd.f32 %v1739, %v1740
    %v1742 = vrot.slane %v1741, 2
    %v1743 = vadd.f32 %v1741, %v1742
    %v1744 = vrot.slane %v1743, 1
    %v1745 = vadd.f32 %v1743, %v1744
    %v1746 = vsel %vm28, %v1714, 0.0
    %v1747 = vrot.slane %v1746, 4
    %v1748 = vadd.f32 %v1746, %v1747
    %v1749 = vrot.slane %v1748, 2
    %v1750 = vadd.f32 %v1748, %v1749
    %v1751 = vrot.slane %v1750, 1
    %v1752 = vadd.f32 %v1750, %v1751
    %v1753 = vsel %vm28, %v1715, 0.0
    %v1754 = vrot.slane %v1753, 4
    %v1755 = vadd.f32 %v1753, %v1754
    %v1756 = vrot.slane %v1755, 2
    %v1757 = vadd.f32 %v1755, %v1756
    %v1758 = vrot.slane %v1757, 1
    %v1759 = vadd.f32 %v1757, %v1758
    %v1760 = vsel %vm28, %v1716, 0.0
    %v1761 = vrot.slane %v1760, 4
    %v1762 = vadd.f32 %v1760, %v1761
    %v1763 = vrot.slane %v1762, 2
    %v1764 = vadd.f32 %v1762, %v1763
    %v1765 = vrot.slane %v1764, 1
    %v1766 = vadd.f32 %v1764, %v1765
    %v1767 = vsel %vm28, %v1717, 0.0
    %v1768 = vrot.slane %v1767, 4
    %v1769 = vadd.f32 %v1767, %v1768
    %v1770 = vrot.slane %v1769, 2
    %v1771 = vadd.f32 %v1769, %v1770
    %v1772 = vrot.slane %v1771, 1
    %v1773 = vadd.f32 %v1771, %v1772
    %v1774 = vmul.f32 %v1724, %v919
    %v1775 = vmul.f32 %v1731, %v920
    %v1776 = vmul.f32 %v1738, %v921
    %v1777 = vmul.f32 %v1745, %v922
    %v1778 = vmul.f32 %v1752, %v923
    %v1779 = vmul.f32 %v1759, %v924
    %v1780 = vmul.f32 %v1766, %v925
    %v1781 = vmul.f32 %v1773, %v926
    %v1782 = vsel %vm28, %v1774, 0.0
    %1783 = vadd.xlane.f32.xlu0 %v1782
    %v1784 = vpop.xlane.xlu0 %1783
    %v1785 = vsel %vm28, %v1775, 0.0
    %1786 = vadd.xlane.f32.xlu0 %v1785
    %v1787 = vpop.xlane.xlu0 %1786
    %v1788 = vsel %vm28, %v1776, 0.0
    %1789 = vadd.xlane.f32.xlu0 %v1788
    %v1790 = vpop.xlane.xlu0 %1789
    %v1791 = vsel %vm28, %v1777, 0.0
    %1792 = vadd.xlane.f32.xlu0 %v1791
    %v1793 = vpop.xlane.xlu0 %1792
    %v1794 = vsel %vm28, %v1778, 0.0
    %1795 = vadd.xlane.f32.xlu0 %v1794
    %v1796 = vpop.xlane.xlu0 %1795
    %v1797 = vsel %vm28, %v1779, 0.0
    %1798 = vadd.xlane.f32.xlu0 %v1797
    %v1799 = vpop.xlane.xlu0 %1798
    %v1800 = vsel %vm28, %v1780, 0.0
    %1801 = vadd.xlane.f32.xlu0 %v1800
    %v1802 = vpop.xlane.xlu0 %1801
    %v1803 = vsel %vm28, %v1781, 0.0
    %1804 = vadd.xlane.f32.xlu0 %v1803
    %v1805 = vpop.xlane.xlu0 %1804
    %v1806 = vld [vmem:[%s2 + $0x1] ss:$0 sm:$0xff]
    %1808 = vset.pattern.permute.xlu0 0
    %1809 = vperm.xlu0 %1808, %v1806
    %v1810 = vpop.permute.xlu0 %1809
    %v1812 = vadd.f32 %v1784, %v1810
    %v1813 = vadd.f32 %v1787, %v1810
    %v1814 = vadd.f32 %v1790, %v1810
    %v1815 = vadd.f32 %v1793, %v1810
    %v1816 = vadd.f32 %v1796, %v1810
    %v1817 = vadd.f32 %v1799, %v1810
    %v1818 = vadd.f32 %v1802, %v1810
    %v1819 = vadd.f32 %v1805, %v1810
    %v1828 = vadd.s32 %v1095, 4294967248
    %v1829 = vperm.slane %v1812, %v1828
    %v1830 = vperm.slane %v1813, %v1828
    %v1831 = vperm.slane %v1814, %v1828
    %v1832 = vperm.slane %v1815, %v1828
    %v1833 = vperm.slane %v1816, %v1828
    %v1834 = vperm.slane %v1817, %v1828
    %v1835 = vperm.slane %v1818, %v1828
    %v1836 = vperm.slane %v1819, %v1828
    %v1837 = vsel %vm1104, %v1830, %v1829
    %v1838 = vsel %vm1106, %v1831, %v1837
    %v1839 = vsel %vm1108, %v1832, %v1838
    %v1840 = vsel %vm1110, %v1833, %v1839
    %v1841 = vsel %vm1112, %v1834, %v1840
    %v1842 = vsel %vm1114, %v1835, %v1841
    %v1843 = vsel %vm1116, %v1836, %v1842
    %vm1845 = vcmask 458112
    %1846 = vst.msk [vmem:[#allocation2] sm:$0xff] %vm1845, %v1843
    %v1847 = vmul.f32 %v1724, %v928
    %v1848 = vmul.f32 %v1731, %v929
    %v1849 = vmul.f32 %v1738, %v930
    %v1850 = vmul.f32 %v1745, %v931
    %v1851 = vmul.f32 %v1752, %v932
    %v1852 = vmul.f32 %v1759, %v933
    %v1853 = vmul.f32 %v1766, %v934
    %v1854 = vmul.f32 %v1773, %v935
    %v1855 = vsel %vm28, %v1847, 0.0
    %1856 = vadd.xlane.f32.xlu0 %v1855
    %v1857 = vpop.xlane.xlu0 %1856
    %v1858 = vsel %vm28, %v1848, 0.0
    %1859 = vadd.xlane.f32.xlu0 %v1858
    %v1860 = vpop.xlane.xlu0 %1859
    %v1861 = vsel %vm28, %v1849, 0.0
    %1862 = vadd.xlane.f32.xlu0 %v1861
    %v1863 = vpop.xlane.xlu0 %1862
    %v1864 = vsel %vm28, %v1850, 0.0
    %1865 = vadd.xlane.f32.xlu0 %v1864
    %v1866 = vpop.xlane.xlu0 %1865
    %v1867 = vsel %vm28, %v1851, 0.0
    %1868 = vadd.xlane.f32.xlu0 %v1867
    %v1869 = vpop.xlane.xlu0 %1868
    %v1870 = vsel %vm28, %v1852, 0.0
    %1871 = vadd.xlane.f32.xlu0 %v1870
    %v1872 = vpop.xlane.xlu0 %1871
    %v1873 = vsel %vm28, %v1853, 0.0
    %1874 = vadd.xlane.f32.xlu0 %v1873
    %v1875 = vpop.xlane.xlu0 %1874
    %v1876 = vsel %vm28, %v1854, 0.0
    %1877 = vadd.xlane.f32.xlu0 %v1876
    %v1878 = vpop.xlane.xlu0 %1877
    %v1879 = vld [vmem:[%s2 + $0x1] ss:$0 sm:$0xff]
    %1881 = vset.pattern.permute.xlu0 1
    %1882 = vperm.xlu0 %1881, %v1879
    %v1883 = vpop.permute.xlu0 %1882
    %v1885 = vadd.f32 %v1857, %v1883
    %v1886 = vadd.f32 %v1860, %v1883
    %v1887 = vadd.f32 %v1863, %v1883
    %v1888 = vadd.f32 %v1866, %v1883
    %v1889 = vadd.f32 %v1869, %v1883
    %v1890 = vadd.f32 %v1872, %v1883
    %v1891 = vadd.f32 %v1875, %v1883
    %v1892 = vadd.f32 %v1878, %v1883
    %v1901 = vadd.s32 %v1095, 4294967240
    %v1902 = vperm.slane %v1885, %v1901
    %v1903 = vperm.slane %v1886, %v1901
    %v1904 = vperm.slane %v1887, %v1901
    %v1905 = vperm.slane %v1888, %v1901
    %v1906 = vperm.slane %v1889, %v1901
    %v1907 = vperm.slane %v1890, %v1901
    %v1908 = vperm.slane %v1891, %v1901
    %v1909 = vperm.slane %v1892, %v1901
    %v1910 = vsel %vm1104, %v1903, %v1902
    %v1911 = vsel %vm1106, %v1904, %v1910
    %v1912 = vsel %vm1108, %v1905, %v1911
    %v1913 = vsel %vm1110, %v1906, %v1912
    %v1914 = vsel %vm1112, %v1907, %v1913
    %v1915 = vsel %vm1114, %v1908, %v1914
    %v1916 = vsel %vm1116, %v1909, %v1915
    %vm1918 = vcmask 523712
    %1919 = vst.msk [vmem:[#allocation2] sm:$0xff] %vm1918, %v1916
    %v1920 = vrot.slane %v96, 4
    %vm1921 = vcmask 1047556
    %v1922 = vsel %vm1921, %v1920, %v94
    %v1923 = vrot.slane %v94, 4
    %v1924 = vsel %vm1921, %v96, %v1923
    %v1926 = vunpack.c.l.s4 1983009808
    %v1927 = vunpack.c.0.s8 %v1926
    %v1928 = vperm.slane %v1922, %v1927
    %v1930 = vunpack.c.l.s4 1983009808
    %v1931 = vunpack.c.0.s8 %v1930
    %v1932 = vperm.slane %v1924, %v1931
    %v1933 = vrot.slane %v97, 4
    %v1934 = vsel %vm1921, %v1933, %v95
    %v1935 = vrot.slane %v95, 4
    %v1936 = vsel %vm1921, %v97, %v1935
    %v1938 = vunpack.c.l.s4 1983009808
    %v1939 = vunpack.c.0.s8 %v1938
    %v1940 = vperm.slane %v1934, %v1939
    %v1942 = vunpack.c.l.s4 1983009808
    %v1943 = vunpack.c.0.s8 %v1942
    %v1944 = vperm.slane %v1936, %v1943
    %v1945 = vrot.slane %v100, 4
    %v1946 = vsel %vm1921, %v1945, %v98
    %v1947 = vrot.slane %v98, 4
    %v1948 = vsel %vm1921, %v100, %v1947
    %v1950 = vunpack.c.l.s4 1983009808
    %v1951 = vunpack.c.0.s8 %v1950
    %v1952 = vperm.slane %v1946, %v1951
    %v1954 = vunpack.c.l.s4 1983009808
    %v1955 = vunpack.c.0.s8 %v1954
    %v1956 = vperm.slane %v1948, %v1955
    %v1957 = vrot.slane %v101, 4
    %v1958 = vsel %vm1921, %v1957, %v99
    %v1959 = vrot.slane %v99, 4
    %v1960 = vsel %vm1921, %v101, %v1959
    %v1962 = vunpack.c.l.s4 1983009808
    %v1963 = vunpack.c.0.s8 %v1962
    %v1964 = vperm.slane %v1958, %v1963
    %v1966 = vunpack.c.l.s4 1983009808
    %v1967 = vunpack.c.0.s8 %v1966
    %v1968 = vperm.slane %v1960, %v1967
    %v1969 = vrot.slane %v1940, 4
    %v1970 = vsel %vm1921, %v1969, %v1928
    %v1971 = vrot.slane %v1928, 4
    %v1972 = vsel %vm1921, %v1940, %v1971
    %v1974 = vunpack.c.l.s4 1934713408
    %v1975 = vunpack.c.0.s8 %v1974
    %v1976 = vperm.slane %v1970, %v1975
    %v1978 = vunpack.c.l.s4 1934713408
    %v1979 = vunpack.c.0.s8 %v1978
    %v1980 = vperm.slane %v1972, %v1979
    %v1981 = vrot.slane %v1944, 4
    %v1982 = vsel %vm1921, %v1981, %v1932
    %v1983 = vrot.slane %v1932, 4
    %v1984 = vsel %vm1921, %v1944, %v1983
    %v1986 = vunpack.c.l.s4 1934713408
    %v1987 = vunpack.c.0.s8 %v1986
    %v1988 = vperm.slane %v1982, %v1987
    %v1990 = vunpack.c.l.s4 1934713408
    %v1991 = vunpack.c.0.s8 %v1990
    %v1992 = vperm.slane %v1984, %v1991
    %v1993 = vrot.slane %v1964, 4
    %v1994 = vsel %vm1921, %v1993, %v1952
    %v1995 = vrot.slane %v1952, 4
    %v1996 = vsel %vm1921, %v1964, %v1995
    %v1998 = vunpack.c.l.s4 1934713408
    %v1999 = vunpack.c.0.s8 %v1998
    %v2000 = vperm.slane %v1994, %v1999
    %v2002 = vunpack.c.l.s4 1934713408
    %v2003 = vunpack.c.0.s8 %v2002
    %v2004 = vperm.slane %v1996, %v2003
    %v2005 = vrot.slane %v1968, 4
    %v2006 = vsel %vm1921, %v2005, %v1956
    %v2007 = vrot.slane %v1956, 4
    %v2008 = vsel %vm1921, %v1968, %v2007
    %v2010 = vunpack.c.l.s4 1934713408
    %v2011 = vunpack.c.0.s8 %v2010
    %v2012 = vperm.slane %v2006, %v2011
    %v2014 = vunpack.c.l.s4 1934713408
    %v2015 = vunpack.c.0.s8 %v2014
    %v2016 = vperm.slane %v2008, %v2015
    %v2017 = vrot.slane %v2000, 4
    %v2018 = vsel %vm1921, %v2017, %v1976
    %v2019 = vrot.slane %v1976, 4
    %v2020 = vsel %vm1921, %v2000, %v2019
    %v2021 = vrot.slane %v2004, 4
    %v2022 = vsel %vm1921, %v2021, %v1980
    %v2023 = vrot.slane %v1980, 4
    %v2024 = vsel %vm1921, %v2004, %v2023
    %v2025 = vrot.slane %v2012, 4
    %v2026 = vsel %vm1921, %v2025, %v1988
    %v2027 = vrot.slane %v1988, 4
    %v2028 = vsel %vm1921, %v2012, %v2027
    %v2029 = vrot.slane %v2016, 4
    %v2030 = vsel %vm1921, %v2029, %v1992
    %v2031 = vrot.slane %v1992, 4
    %v2032 = vsel %vm1921, %v2016, %v2031
    %2034 = vrot.lane.b32.xlu0 %v2020, 4
    %v2035 = vpop.permute.xlu0 %2034
    %2038 = vrot.lane.b32.xlu0 %v2022, 8
    %v2039 = vpop.permute.xlu0 %2038
    %2042 = vrot.lane.b32.xlu0 %v2024, 12
    %v2043 = vpop.permute.xlu0 %2042
    %2046 = vrot.lane.b32.xlu0 %v2026, 16
    %v2047 = vpop.permute.xlu0 %2046
    %2050 = vrot.lane.b32.xlu0 %v2028, 20
    %v2051 = vpop.permute.xlu0 %2050
    %2054 = vrot.lane.b32.xlu0 %v2030, 24
    %v2055 = vpop.permute.xlu0 %2054
    %2058 = vrot.lane.b32.xlu0 %v2032, 28
    %v2059 = vpop.permute.xlu0 %2058
    %vm2061 = vcmask 31744
    %v2062 = vsel %vm2061, %v2018, %v2035
    %v2063 = vsel %vm1119, %v2062, %v2039
    %vm2064 = vcmask 97280
    %v2065 = vsel %vm2064, %v2063, %v2043
    %vm2066 = vcmask 130048
    %v2067 = vsel %vm2066, %v2065, %v2047
    %vm2068 = vcmask 162816
    %v2069 = vsel %vm2068, %v2067, %v2051
    %vm2070 = vcmask 195584
    %v2071 = vsel %vm2070, %v2069, %v2055
    %vm2072 = vcmask 228352
    %v2073 = vsel %vm2072, %v2071, %v2059
    %2075 = vrot.lane.b32.xlu0 %v2073, 64
    %v2076 = vpop.permute.xlu0 %2075
    %vm2078 = vcmask 785920
    %2079 = vst.msk [vmem:[#allocation2] sm:$0xff] %vm2078, %v2076
    %2080 = vrot.lane.b32.xlu0 %v94, 124
    %v2081 = vpop.permute.xlu0 %2080
    %2082 = vrot.lane.b32.xlu0 %v95, 124
    %v2083 = vpop.permute.xlu0 %2082
    %2084 = vrot.lane.b32.xlu0 %v96, 124
    %v2085 = vpop.permute.xlu0 %2084
    %2086 = vrot.lane.b32.xlu0 %v97, 124
    %v2087 = vpop.permute.xlu0 %2086
    %2088 = vrot.lane.b32.xlu0 %v98, 124
    %v2089 = vpop.permute.xlu0 %2088
    %2090 = vrot.lane.b32.xlu0 %v99, 124
    %v2091 = vpop.permute.xlu0 %2090
    %2092 = vrot.lane.b32.xlu0 %v100, 124
    %v2093 = vpop.permute.xlu0 %2092
    %2094 = vrot.lane.b32.xlu0 %v101, 124
    %v2095 = vpop.permute.xlu0 %2094
    %v2104 = vrot.slane %v2085, 4
    %v2105 = vsel %vm1921, %v2104, %v2081
    %v2106 = vrot.slane %v2081, 4
    %v2107 = vsel %vm1921, %v2085, %v2106
    %v2109 = vunpack.c.l.s4 1983009808
    %v2110 = vunpack.c.0.s8 %v2109
    %v2111 = vperm.slane %v2105, %v2110
    %v2113 = vunpack.c.l.s4 1983009808
    %v2114 = vunpack.c.0.s8 %v2113
    %v2115 = vperm.slane %v2107, %v2114
    %v2116 = vrot.slane %v2087, 4
    %v2117 = vsel %vm1921, %v2116, %v2083
    %v2118 = vrot.slane %v2083, 4
    %v2119 = vsel %vm1921, %v2087, %v2118
    %v2121 = vunpack.c.l.s4 1983009808
    %v2122 = vunpack.c.0.s8 %v2121
    %v2123 = vperm.slane %v2117, %v2122
    %v2125 = vunpack.c.l.s4 1983009808
    %v2126 = vunpack.c.0.s8 %v2125
    %v2127 = vperm.slane %v2119, %v2126
    %v2128 = vrot.slane %v2093, 4
    %v2129 = vsel %vm1921, %v2128, %v2089
    %v2130 = vrot.slane %v2089, 4
    %v2131 = vsel %vm1921, %v2093, %v2130
    %v2133 = vunpack.c.l.s4 1983009808
    %v2134 = vunpack.c.0.s8 %v2133
    %v2135 = vperm.slane %v2129, %v2134
    %v2137 = vunpack.c.l.s4 1983009808
    %v2138 = vunpack.c.0.s8 %v2137
    %v2139 = vperm.slane %v2131, %v2138
    %v2140 = vrot.slane %v2095, 4
    %v2141 = vsel %vm1921, %v2140, %v2091
    %v2142 = vrot.slane %v2091, 4
    %v2143 = vsel %vm1921, %v2095, %v2142
    %v2145 = vunpack.c.l.s4 1983009808
    %v2146 = vunpack.c.0.s8 %v2145
    %v2147 = vperm.slane %v2141, %v2146
    %v2149 = vunpack.c.l.s4 1983009808
    %v2150 = vunpack.c.0.s8 %v2149
    %v2151 = vperm.slane %v2143, %v2150
    %v2152 = vrot.slane %v2123, 4
    %v2153 = vsel %vm1921, %v2152, %v2111
    %v2154 = vrot.slane %v2111, 4
    %v2155 = vsel %vm1921, %v2123, %v2154
    %v2157 = vunpack.c.l.s4 1934713408
    %v2158 = vunpack.c.0.s8 %v2157
    %v2159 = vperm.slane %v2153, %v2158
    %v2161 = vunpack.c.l.s4 1934713408
    %v2162 = vunpack.c.0.s8 %v2161
    %v2163 = vperm.slane %v2155, %v2162
    %v2164 = vrot.slane %v2127, 4
    %v2165 = vsel %vm1921, %v2164, %v2115
    %v2166 = vrot.slane %v2115, 4
    %v2167 = vsel %vm1921, %v2127, %v2166
    %v2169 = vunpack.c.l.s4 1934713408
    %v2170 = vunpack.c.0.s8 %v2169
    %v2171 = vperm.slane %v2165, %v2170
    %v2173 = vunpack.c.l.s4 1934713408
    %v2174 = vunpack.c.0.s8 %v2173
    %v2175 = vperm.slane %v2167, %v2174
    %v2176 = vrot.slane %v2147, 4
    %v2177 = vsel %vm1921, %v2176, %v2135
    %v2178 = vrot.slane %v2135, 4
    %v2179 = vsel %vm1921, %v2147, %v2178
    %v2181 = vunpack.c.l.s4 1934713408
    %v2182 = vunpack.c.0.s8 %v2181
    %v2183 = vperm.slane %v2177, %v2182
    %v2185 = vunpack.c.l.s4 1934713408
    %v2186 = vunpack.c.0.s8 %v2185
    %v2187 = vperm.slane %v2179, %v2186
    %v2188 = vrot.slane %v2151, 4
    %v2189 = vsel %vm1921, %v2188, %v2139
    %v2190 = vrot.slane %v2139, 4
    %v2191 = vsel %vm1921, %v2151, %v2190
    %v2193 = vunpack.c.l.s4 1934713408
    %v2194 = vunpack.c.0.s8 %v2193
    %v2195 = vperm.slane %v2189, %v2194
    %v2197 = vunpack.c.l.s4 1934713408
    %v2198 = vunpack.c.0.s8 %v2197
    %v2199 = vperm.slane %v2191, %v2198
    %v2200 = vrot.slane %v2183, 4
    %v2201 = vsel %vm1921, %v2200, %v2159
    %v2202 = vrot.slane %v2159, 4
    %v2203 = vsel %vm1921, %v2183, %v2202
    %v2204 = vrot.slane %v2187, 4
    %v2205 = vsel %vm1921, %v2204, %v2163
    %v2206 = vrot.slane %v2163, 4
    %v2207 = vsel %vm1921, %v2187, %v2206
    %v2208 = vrot.slane %v2195, 4
    %v2209 = vsel %vm1921, %v2208, %v2171
    %v2210 = vrot.slane %v2171, 4
    %v2211 = vsel %vm1921, %v2195, %v2210
    %v2212 = vrot.slane %v2199, 4
    %v2213 = vsel %vm1921, %v2212, %v2175
    %v2214 = vrot.slane %v2175, 4
    %v2215 = vsel %vm1921, %v2199, %v2214
    %2217 = vrot.lane.b32.xlu0 %v2203, 8
    %v2218 = vpop.permute.xlu0 %2217
    %2221 = vrot.lane.b32.xlu0 %v2205, 16
    %v2222 = vpop.permute.xlu0 %2221
    %2225 = vrot.lane.b32.xlu0 %v2207, 24
    %v2226 = vpop.permute.xlu0 %2225
    %2229 = vrot.lane.b32.xlu0 %v2209, 32
    %v2230 = vpop.permute.xlu0 %2229
    %2233 = vrot.lane.b32.xlu0 %v2211, 40
    %v2234 = vpop.permute.xlu0 %2233
    %2237 = vrot.lane.b32.xlu0 %v2213, 48
    %v2238 = vpop.permute.xlu0 %2237
    %2241 = vrot.lane.b32.xlu0 %v2215, 56
    %v2242 = vpop.permute.xlu0 %2241
    %v2244 = vsel %vm1119, %v2201, %v2218
    %v2245 = vsel %vm2066, %v2244, %v2222
    %v2246 = vsel %vm2070, %v2245, %v2226
    %v2247 = vsel %vm28, %v2246, %v2230
    %vm2248 = vcmask 326656
    %v2249 = vsel %vm2248, %v2247, %v2234
    %vm2250 = vcmask 392192
    %v2251 = vsel %vm2250, %v2249, %v2238
    %vm2252 = vcmask 457728
    %v2253 = vsel %vm2252, %v2251, %v2242
    %2255 = vrot.lane.b32.xlu0 %v2253, 96
    %v2256 = vpop.permute.xlu0 %2255
    %vm2258 = vcmask 1048320
    %2259 = vst.msk [vmem:[#allocation2] sm:$0xff] %vm2258, %v2256
    %2260 = vst.msk [vmem:[#allocation2 + $0x8] sm:$0xff] %vm28, %v2256
    %vm2261 = vcmask 1047808
    %2262 = vst.msk [vmem:[#allocation2 + $0x8] sm:$0xff] %vm2261, 0.0
    // Predicated region
    $region14: #{tpu_custom_call.1} parent=1 // pred_check
      _
    $region15: #{tpu_custom_call.1} parent=1 // pred_check_branch
      %2264 = sbr.rel (0) target = $region17
    $region16: #{tpu_custom_call.1} parent=1 // pred_region
      %2266 = vsyncadd [#allocation3], 0
      %s2268 = sshll.u32 [#allocation2], 4
      %s2269 = int_to_ptr.vmem [resolvable:$true] %s2268
      %s2270 = sshll.u32 %s3, 4
      %s2271 = int_to_ptr.hbm [resolvable:$true] %s2270
      %2273 = dma.vmem_to_hbm [thread:$0]  %s2269, 256, %s2271, [#allocation3]
    $region17: #{tpu_custom_call.1} parent=1 // pred_fallthru
      _
    // Predicated region
    $region18: #{tpu_custom_call.1} parent=1 // pred_check
      _
    $region19: #{tpu_custom_call.1} parent=1 // pred_check_branch
      %2275 = sbr.rel (0) target = $region21
    $region20: #{tpu_custom_call.1} parent=1 // pred_region
      %2277 = dma.done [#allocation3], 256
    $region21: #{tpu_custom_call.1} parent=1 // pred_fallthru
      _
    %2278 = vsyncpa [#allocation3], 1

</llo_original>
